<compile_context>
chip_gen: v7x
topology: tpu7x:2x2x1
jax: 0.10.0
libtpu: 0.0.40
codegen_flags: <defaults>
</compile_context>

<pallas_src>
import functools

import jax
import jax.numpy as jnp
import numpy as np
from jax.experimental import pallas as pl
from jax.experimental.pallas import tpu as pltpu

EPS = 1e-3                       # BlockFCN passes eps=0.001 to BatchNorm1d
CHANNELS = (1, 128, 256, 128)
KERNELS = (8, 5, 3)
LANE = 128
PAD = 32                         # padded per-sequence length (mult. of 8/16/32)


def _block_fcn_kernel(x_ref, w1_ref, g1_ref, be1_ref,
                      w2_ref, g2_ref, be2_ref,
                      w3_ref, g3_ref, be3_ref,
                      out_ref, *, batch, lens, taps):
    """Fused conv1+BN+ReLU -> conv2+BN+ReLU -> conv3+BN+ReLU -> global avg pool.

    Activations live as (batch*PAD, C): each sequence owns an aligned 32-row
    segment; rows [L_i, PAD) of a segment are padding and are masked out of
    the BN statistics and the pooling.
    """
    l1, l2, l3 = lens
    _, k2, k3 = taps
    m = batch * PAD

    # Row index within each 32-row segment (hoisted once; PAD is a power of 2).
    row = jax.lax.broadcasted_iota(jnp.int32, (m, 1), 0) % PAD

    def bn_relu(y, gamma, beta, l_valid):
        """Training-mode BatchNorm1d (biased batch variance) + ReLU, in f32."""
        maskf = (row < l_valid).astype(jnp.float32)            # (M, 1)
        ym = y * maskf                                          # zero pad rows
        inv_n = jnp.float32(1.0 / (batch * l_valid))
        s = jnp.sum(ym, axis=0, keepdims=True)                  # (1, C)
        ss = jnp.sum(ym * ym, axis=0, keepdims=True)            # (1, C)
        mean = s * inv_n
        var = jnp.maximum(ss * inv_n - mean * mean, 0.0)        # biased var
        scale = gamma * jax.lax.rsqrt(var + EPS)                # EUP rsqrt
        shift = beta - mean * scale
        return jnp.maximum(y * scale + shift, 0.0)

    def im2col(y_f32, k):
        """(M, C) -> (M, k*C).  Tap t = roll-up-by-t along the aligned row
        axis (XLU sublane rotate); taps concatenated along full-lane channel
        blocks.  Valid row j then holds [y[j], y[j+1], ..., y[j+k-1]]."""
        pieces = []
        for t in range(k):
            yt = y_f32 if t == 0 else pltpu.roll(y_f32, shift=m - t, axis=0)
            pieces.append(yt.astype(jnp.bfloat16))
        return jnp.concatenate(pieces, axis=-1)

    # ----- layer 1: input already im2col'd (lane-padded to 128) and bf16.
    y = jnp.dot(x_ref[...], w1_ref[...], preferred_element_type=jnp.float32)
    y = bn_relu(y, g1_ref[...], be1_ref[...], l1)               # (M, C1)

    # ----- layer 2
    xc = im2col(y, k2)                                          # (M, K2*C1)
    y = jnp.dot(xc, w2_ref[...], preferred_element_type=jnp.float32)
    y = bn_relu(y, g2_ref[...], be2_ref[...], l2)               # (M, C2)

    # ----- layer 3
    xc = im2col(y, k3)                                          # (M, K3*C2)
    y = jnp.dot(xc, w3_ref[...], preferred_element_type=jnp.float32)
    y = bn_relu(y, g3_ref[...], be3_ref[...], l3)               # (M, C3)

    # ----- global average pooling over the l3 valid rows of each segment.
    ym = y * (row < l3).astype(jnp.float32)
    inv_l3 = jnp.float32(1.0 / l3)
    pooled = [jnp.sum(ym[b * PAD:(b + 1) * PAD, :], axis=0, keepdims=True)
              * inv_l3
              for b in range(batch)]                            # aligned slices
    out_ref[...] = jnp.concatenate(pooled, axis=0)              # (B, C3)


def init_params(key, channels=CHANNELS, kernels=KERNELS):
    """Returns (kernel_params, ref_params).

    kernel_params: [w1, g1, b1, w2, g2, b2, w3, g3, b3]; conv weights in
      im2col layout (k*cin, cout) bf16 (w1 zero-padded to 128 contraction
      rows), BN gamma/beta as (1, cout) f32.  Conv bias omitted — it is
      exactly cancelled by the training-mode BN mean subtraction.
    ref_params: per-layer (w f32 (k*cin, cout), bias, gamma, beta) for the
      pure-JAX f32 reference (which keeps the bias).
    """
    kparams, rparams = [], []
    for i, k in enumerate(kernels):
        cin, cout = channels[i], channels[i + 1]
        key, kw, kb, kg, kbe = jax.random.split(key, 5)
        bound = (1.0 / (cin * k)) ** 0.5
        w = jax.random.uniform(kw, (k * cin, cout), jnp.float32, -bound, bound)
        bias = jax.random.uniform(kb, (cout,), jnp.float32, -bound, bound)
        gamma = jax.random.uniform(kg, (cout,), jnp.float32, 0.5, 1.5)
        beta = jax.random.uniform(kbe, (cout,), jnp.float32, -0.5, 0.5)
        wk = w
        if i == 0:                                   # pad contraction 8 -> 128
            wk = jnp.pad(wk, ((0, LANE - k * cin), (0, 0)))
        kparams += [wk.astype(jnp.bfloat16),
                    gamma.reshape(1, cout), beta.reshape(1, cout)]
        rparams.append((w, bias, gamma, beta))
    return kparams, rparams


@jax.jit
def block_fcn_forward(x_ncw, params):
    """x_ncw: (B, 1, T) PyTorch NCW layout -> (B, C3, 1)."""
    w1, g1, b1, w2, g2, b2, w3, g3, b3 = params
    B, _, T = x_ncw.shape
    k1, k2, k3 = KERNELS
    c3 = CHANNELS[-1]
    l1 = T - k1 + 1
    l2 = l1 - k2 + 1
    l3 = l2 - k3 + 1
    assert l1 <= PAD and l3 >= 1

    # Lane-dense, sublane-aligned im2col of the Cin=1 first layer:
    # (B, 1, T) -> (B*PAD, 128) bf16; taps in columns [0, k1), zeros elsewhere,
    # rows [l1, PAD) of each segment zero.
    x2d = x_ncw[:, 0, :]                                            # (B, T)
    xcol = jnp.stack([x2d[:, t:t + l1] for t in range(k1)], axis=-1)  # (B,L1,K1)
    xcol = jnp.pad(xcol, ((0, 0), (0, PAD - l1), (0, LANE - k1)))
    xcol1 = xcol.reshape(B * PAD, LANE).astype(jnp.bfloat16)

    kernel = functools.partial(_block_fcn_kernel, batch=B,
                               lens=(l1, l2, l3), taps=(k1, k2, k3))
    vmem = pl.BlockSpec(memory_space=pltpu.MemorySpace.VMEM)
    out = pl.pallas_call(
        kernel,
        out_shape=jax.ShapeDtypeStruct((B, c3), jnp.float32),
        in_specs=[vmem] * 10,
        out_specs=vmem,
    )(xcol1, w1, g1, b1, w2, g2, b2, w3, g3, b3)
    return out[:, :, None]                                          # (B, C3, 1)


def reference_forward(x_ncw, ref_params):
    """Pure-JAX f32 reference with full PyTorch semantics (conv bias kept,
    training-mode BatchNorm, biased batch variance, eps=1e-3)."""
    h = x_ncw.transpose(0, 2, 1).astype(jnp.float32)                # (B, L, Cin)
    for (w, bias, gamma, beta), k in zip(ref_params, KERNELS):
        l_out = h.shape[1] - k + 1
        xc = jnp.concatenate([h[:, t:t + l_out, :] for t in range(k)], axis=-1)
        y = jnp.einsum('blk,kc->blc', xc, w) + bias                 # Conv1d
        mean = jnp.mean(y, axis=(0, 1), keepdims=True)
        var = jnp.mean(jnp.square(y - mean), axis=(0, 1), keepdims=True)
        y = (y - mean) * (gamma / jnp.sqrt(var + EPS)) + beta       # BatchNorm1d
        h = jnp.maximum(y, 0.0)                                     # ReLU
    return jnp.mean(h, axis=1)[:, :, None]                          # AvgPool1d


if __name__ == "__main__":
    key = jax.random.PRNGKey(0)
    kx, kp = jax.random.split(key)

    B, T = 2, 32                       # time_steps=32 > sum(kernels) - 3
    x = jax.random.normal(kx, (B, 1, T), jnp.float32)   # PyTorch NCW input
    kparams, rparams = init_params(kp)

    y = block_fcn_forward(x, kparams)
    jax.block_until_ready(y)
    assert y.shape == (B, CHANNELS[-1], 1) and y.dtype == jnp.float32

    # Validate against a pure-JAX f32 reference (loose tol: bf16 MXU operands).
    y_ref = reference_forward(x, rparams)
    np.testing.assert_allclose(np.asarray(y), np.asarray(y_ref),
                               atol=5e-2, rtol=5e-2)
    print("KERNEL_OK")
</pallas_src>

<mosaic_0001>
module attributes {stable_mosaic.version = 11 : i64} {
  func.func @_block_fcn_kernel(%arg0: memref<64x128xbf16, #tpu.memory_space<vmem>>, %arg1: memref<128x128xbf16, #tpu.memory_space<vmem>>, %arg2: memref<1x128xf32, #tpu.memory_space<vmem>>, %arg3: memref<1x128xf32, #tpu.memory_space<vmem>>, %arg4: memref<640x256xbf16, #tpu.memory_space<vmem>>, %arg5: memref<1x256xf32, #tpu.memory_space<vmem>>, %arg6: memref<1x256xf32, #tpu.memory_space<vmem>>, %arg7: memref<768x128xbf16, #tpu.memory_space<vmem>>, %arg8: memref<1x128xf32, #tpu.memory_space<vmem>>, %arg9: memref<1x128xf32, #tpu.memory_space<vmem>>, %arg10: memref<2x128xf32, #tpu.memory_space<vmem>>) attributes {dimension_semantics = [], scalar_prefetch = 0 : i64, scratch_operands = 0 : i64, tpu.core_type = #tpu.core_type<tc>} {
    %0 = tpu.iota {dimensions = array<i32: 0>} : vector<64x1xi32>
    %c32_i32 = arith.constant 32 : i32
    %c0_i32 = arith.constant 0 : i32
    %1 = arith.cmpi eq, %c32_i32, %c0_i32 : i32
    %c1_i32 = arith.constant 1 : i32
    %2 = arith.select %1, %c1_i32, %c32_i32 : i32
    %3 = vector.broadcast %2 : i32 to vector<64x1xi32>
    %4 = arith.remsi %0, %3 : vector<64x1xi32>
    %c0_i32_0 = arith.constant 0 : i32
    %5 = vector.broadcast %c0_i32_0 : i32 to vector<64x1xi32>
    %6 = arith.cmpi ne, %4, %5 : vector<64x1xi32>
    %c0_i32_1 = arith.constant 0 : i32
    %7 = vector.broadcast %c0_i32_1 : i32 to vector<64x1xi32>
    %8 = arith.cmpi slt, %4, %7 : vector<64x1xi32>
    %c0_i32_2 = arith.constant 0 : i32
    %9 = arith.cmpi slt, %2, %c0_i32_2 : i32
    %10 = vector.broadcast %9 : i1 to vector<64x1xi1>
    %11 = vector.broadcast %10 : vector<64x1xi1> to vector<64x1xi1>
    %12 = arith.xori %8, %11 : vector<64x1xi1>
    %13 = arith.andi %12, %6 : vector<64x1xi1>
    %14 = vector.broadcast %2 : i32 to vector<64x1xi32>
    %15 = arith.addi %4, %14 : vector<64x1xi32>
    %16 = arith.select %13, %15, %4 : vector<64x1xi1>, vector<64x1xi32>
    %c0 = arith.constant 0 : index
    %c0_3 = arith.constant 0 : index
    %17 = vector.load %arg0[%c0, %c0_3] : memref<64x128xbf16, #tpu.memory_space<vmem>>, vector<64x128xbf16>
    %c0_4 = arith.constant 0 : index
    %c0_5 = arith.constant 0 : index
    %18 = vector.load %arg1[%c0_4, %c0_5] : memref<128x128xbf16, #tpu.memory_space<vmem>>, vector<128x128xbf16>
    %cst = arith.constant dense<0.000000e+00> : vector<64x128xf32>
    %19 = tpu.matmul %17, %18, %cst {dimension_numbers = #tpu.dot_dimension_numbers<[1], [0], [0], [1], [0, 0, 1, 1], [], []>} : vector<64x128xbf16>, vector<128x128xbf16>, vector<64x128xf32> -> vector<64x128xf32>
    %c0_6 = arith.constant 0 : index
    %c0_7 = arith.constant 0 : index
    %20 = vector.load %arg2[%c0_6, %c0_7] : memref<1x128xf32, #tpu.memory_space<vmem>>, vector<1x128xf32>
    %c0_8 = arith.constant 0 : index
    %c0_9 = arith.constant 0 : index
    %21 = vector.load %arg3[%c0_8, %c0_9] : memref<1x128xf32, #tpu.memory_space<vmem>>, vector<1x128xf32>
    %c25_i32 = arith.constant 25 : i32
    %22 = vector.broadcast %c25_i32 : i32 to vector<64x1xi32>
    %23 = arith.cmpi slt, %16, %22 : vector<64x1xi32>
    %24 = arith.extui %23 : vector<64x1xi1> to vector<64x1xi32>
    %25 = arith.sitofp %24 : vector<64x1xi32> to vector<64x1xf32>
    %26 = vector.broadcast %25 : vector<64x1xf32> to vector<64x128xf32>
    %27 = arith.mulf %19, %26 : vector<64x128xf32>
    %cst_10 = arith.constant dense<0.000000e+00> : vector<128xf32>
    %28 = vector.multi_reduction <add>, %27, %cst_10 [0] : vector<64x128xf32> to vector<128xf32>
    %29 = vector.shape_cast %28 : vector<128xf32> to vector<1x128xf32>
    %30 = arith.mulf %27, %27 : vector<64x128xf32>
    %cst_11 = arith.constant dense<0.000000e+00> : vector<128xf32>
    %31 = vector.multi_reduction <add>, %30, %cst_11 [0] : vector<64x128xf32> to vector<128xf32>
    %32 = vector.shape_cast %31 : vector<128xf32> to vector<1x128xf32>
    %cst_12 = arith.constant 2.000000e-02 : f32
    %33 = vector.broadcast %cst_12 : f32 to vector<1x128xf32>
    %34 = arith.mulf %29, %33 : vector<1x128xf32>
    %cst_13 = arith.constant 2.000000e-02 : f32
    %35 = vector.broadcast %cst_13 : f32 to vector<1x128xf32>
    %36 = arith.mulf %32, %35 : vector<1x128xf32>
    %37 = arith.mulf %34, %34 : vector<1x128xf32>
    %38 = arith.subf %36, %37 : vector<1x128xf32>
    %cst_14 = arith.constant 0.000000e+00 : f32
    %39 = vector.broadcast %cst_14 : f32 to vector<1x128xf32>
    %40 = arith.maximumf %38, %39 : vector<1x128xf32>
    %cst_15 = arith.constant 1.000000e-03 : f32
    %41 = vector.broadcast %cst_15 : f32 to vector<1x128xf32>
    %42 = arith.addf %40, %41 : vector<1x128xf32>
    %43 = math.rsqrt %42 : vector<1x128xf32>
    %44 = arith.mulf %20, %43 : vector<1x128xf32>
    %45 = arith.mulf %34, %44 : vector<1x128xf32>
    %46 = arith.subf %21, %45 : vector<1x128xf32>
    %47 = vector.broadcast %44 : vector<1x128xf32> to vector<64x128xf32>
    %48 = arith.mulf %19, %47 : vector<64x128xf32>
    %49 = vector.broadcast %46 : vector<1x128xf32> to vector<64x128xf32>
    %50 = arith.addf %48, %49 : vector<64x128xf32>
    %cst_16 = arith.constant 0.000000e+00 : f32
    %51 = vector.broadcast %cst_16 : f32 to vector<64x128xf32>
    %52 = arith.maximumf %50, %51 : vector<64x128xf32>
    %53 = arith.truncf %52 : vector<64x128xf32> to vector<64x128xbf16>
    %c63_i32 = arith.constant 63 : i32
    %54 = tpu.dynamic_rotate %52 by %c63_i32 dim 0 : vector<64x128xf32>, i32 -> vector<64x128xf32>
    %55 = arith.truncf %54 : vector<64x128xf32> to vector<64x128xbf16>
    %c62_i32 = arith.constant 62 : i32
    %56 = tpu.dynamic_rotate %52 by %c62_i32 dim 0 : vector<64x128xf32>, i32 -> vector<64x128xf32>
    %57 = arith.truncf %56 : vector<64x128xf32> to vector<64x128xbf16>
    %c61_i32 = arith.constant 61 : i32
    %58 = tpu.dynamic_rotate %52 by %c61_i32 dim 0 : vector<64x128xf32>, i32 -> vector<64x128xf32>
    %59 = arith.truncf %58 : vector<64x128xf32> to vector<64x128xbf16>
    %c60_i32 = arith.constant 60 : i32
    %60 = tpu.dynamic_rotate %52 by %c60_i32 dim 0 : vector<64x128xf32>, i32 -> vector<64x128xf32>
    %61 = arith.truncf %60 : vector<64x128xf32> to vector<64x128xbf16>
    %62 = tpu.concatenate %53, %55, %57, %59, %61 in 1 : vector<64x128xbf16>, vector<64x128xbf16>, vector<64x128xbf16>, vector<64x128xbf16>, vector<64x128xbf16> -> vector<64x640xbf16>
    %c0_17 = arith.constant 0 : index
    %c0_18 = arith.constant 0 : index
    %63 = vector.load %arg4[%c0_17, %c0_18] : memref<640x256xbf16, #tpu.memory_space<vmem>>, vector<640x256xbf16>
    %cst_19 = arith.constant dense<0.000000e+00> : vector<64x256xf32>
    %64 = tpu.matmul %62, %63, %cst_19 {dimension_numbers = #tpu.dot_dimension_numbers<[1], [0], [0], [1], [0, 0, 1, 1], [], []>} : vector<64x640xbf16>, vector<640x256xbf16>, vector<64x256xf32> -> vector<64x256xf32>
    %c0_20 = arith.constant 0 : index
    %c0_21 = arith.constant 0 : index
    %65 = vector.load %arg5[%c0_20, %c0_21] : memref<1x256xf32, #tpu.memory_space<vmem>>, vector<1x256xf32>
    %c0_22 = arith.constant 0 : index
    %c0_23 = arith.constant 0 : index
    %66 = vector.load %arg6[%c0_22, %c0_23] : memref<1x256xf32, #tpu.memory_space<vmem>>, vector<1x256xf32>
    %c21_i32 = arith.constant 21 : i32
    %67 = vector.broadcast %c21_i32 : i32 to vector<64x1xi32>
    %68 = arith.cmpi slt, %16, %67 : vector<64x1xi32>
    %69 = arith.extui %68 : vector<64x1xi1> to vector<64x1xi32>
    %70 = arith.sitofp %69 : vector<64x1xi32> to vector<64x1xf32>
    %71 = vector.broadcast %70 : vector<64x1xf32> to vector<64x256xf32>
    %72 = arith.mulf %64, %71 : vector<64x256xf32>
    %cst_24 = arith.constant dense<0.000000e+00> : vector<256xf32>
    %73 = vector.multi_reduction <add>, %72, %cst_24 [0] : vector<64x256xf32> to vector<256xf32>
    %74 = vector.shape_cast %73 : vector<256xf32> to vector<1x256xf32>
    %75 = arith.mulf %72, %72 : vector<64x256xf32>
    %cst_25 = arith.constant dense<0.000000e+00> : vector<256xf32>
    %76 = vector.multi_reduction <add>, %75, %cst_25 [0] : vector<64x256xf32> to vector<256xf32>
    %77 = vector.shape_cast %76 : vector<256xf32> to vector<1x256xf32>
    %cst_26 = arith.constant 0.0238095243 : f32
    %78 = vector.broadcast %cst_26 : f32 to vector<1x256xf32>
    %79 = arith.mulf %74, %78 : vector<1x256xf32>
    %cst_27 = arith.constant 0.0238095243 : f32
    %80 = vector.broadcast %cst_27 : f32 to vector<1x256xf32>
    %81 = arith.mulf %77, %80 : vector<1x256xf32>
    %82 = arith.mulf %79, %79 : vector<1x256xf32>
    %83 = arith.subf %81, %82 : vector<1x256xf32>
    %cst_28 = arith.constant 0.000000e+00 : f32
    %84 = vector.broadcast %cst_28 : f32 to vector<1x256xf32>
    %85 = arith.maximumf %83, %84 : vector<1x256xf32>
    %cst_29 = arith.constant 1.000000e-03 : f32
    %86 = vector.broadcast %cst_29 : f32 to vector<1x256xf32>
    %87 = arith.addf %85, %86 : vector<1x256xf32>
    %88 = math.rsqrt %87 : vector<1x256xf32>
    %89 = arith.mulf %65, %88 : vector<1x256xf32>
    %90 = arith.mulf %79, %89 : vector<1x256xf32>
    %91 = arith.subf %66, %90 : vector<1x256xf32>
    %92 = vector.broadcast %89 : vector<1x256xf32> to vector<64x256xf32>
    %93 = arith.mulf %64, %92 : vector<64x256xf32>
    %94 = vector.broadcast %91 : vector<1x256xf32> to vector<64x256xf32>
    %95 = arith.addf %93, %94 : vector<64x256xf32>
    %cst_30 = arith.constant 0.000000e+00 : f32
    %96 = vector.broadcast %cst_30 : f32 to vector<64x256xf32>
    %97 = arith.maximumf %95, %96 : vector<64x256xf32>
    %98 = arith.truncf %97 : vector<64x256xf32> to vector<64x256xbf16>
    %c63_i32_31 = arith.constant 63 : i32
    %99 = tpu.dynamic_rotate %97 by %c63_i32_31 dim 0 : vector<64x256xf32>, i32 -> vector<64x256xf32>
    %100 = arith.truncf %99 : vector<64x256xf32> to vector<64x256xbf16>
    %c62_i32_32 = arith.constant 62 : i32
    %101 = tpu.dynamic_rotate %97 by %c62_i32_32 dim 0 : vector<64x256xf32>, i32 -> vector<64x256xf32>
    %102 = arith.truncf %101 : vector<64x256xf32> to vector<64x256xbf16>
    %103 = tpu.concatenate %98, %100, %102 in 1 : vector<64x256xbf16>, vector<64x256xbf16>, vector<64x256xbf16> -> vector<64x768xbf16>
    %c0_33 = arith.constant 0 : index
    %c0_34 = arith.constant 0 : index
    %104 = vector.load %arg7[%c0_33, %c0_34] : memref<768x128xbf16, #tpu.memory_space<vmem>>, vector<768x128xbf16>
    %cst_35 = arith.constant dense<0.000000e+00> : vector<64x128xf32>
    %105 = tpu.matmul %103, %104, %cst_35 {dimension_numbers = #tpu.dot_dimension_numbers<[1], [0], [0], [1], [0, 0, 1, 1], [], []>} : vector<64x768xbf16>, vector<768x128xbf16>, vector<64x128xf32> -> vector<64x128xf32>
    %c0_36 = arith.constant 0 : index
    %c0_37 = arith.constant 0 : index
    %106 = vector.load %arg8[%c0_36, %c0_37] : memref<1x128xf32, #tpu.memory_space<vmem>>, vector<1x128xf32>
    %c0_38 = arith.constant 0 : index
    %c0_39 = arith.constant 0 : index
    %107 = vector.load %arg9[%c0_38, %c0_39] : memref<1x128xf32, #tpu.memory_space<vmem>>, vector<1x128xf32>
    %c19_i32 = arith.constant 19 : i32
    %108 = vector.broadcast %c19_i32 : i32 to vector<64x1xi32>
    %109 = arith.cmpi slt, %16, %108 : vector<64x1xi32>
    %110 = arith.extui %109 : vector<64x1xi1> to vector<64x1xi32>
    %111 = arith.sitofp %110 : vector<64x1xi32> to vector<64x1xf32>
    %112 = vector.broadcast %111 : vector<64x1xf32> to vector<64x128xf32>
    %113 = arith.mulf %105, %112 : vector<64x128xf32>
    %cst_40 = arith.constant dense<0.000000e+00> : vector<128xf32>
    %114 = vector.multi_reduction <add>, %113, %cst_40 [0] : vector<64x128xf32> to vector<128xf32>
    %115 = vector.shape_cast %114 : vector<128xf32> to vector<1x128xf32>
    %116 = arith.mulf %113, %113 : vector<64x128xf32>
    %cst_41 = arith.constant dense<0.000000e+00> : vector<128xf32>
    %117 = vector.multi_reduction <add>, %116, %cst_41 [0] : vector<64x128xf32> to vector<128xf32>
    %118 = vector.shape_cast %117 : vector<128xf32> to vector<1x128xf32>
    %cst_42 = arith.constant 0.0263157897 : f32
    %119 = vector.broadcast %cst_42 : f32 to vector<1x128xf32>
    %120 = arith.mulf %115, %119 : vector<1x128xf32>
    %cst_43 = arith.constant 0.0263157897 : f32
    %121 = vector.broadcast %cst_43 : f32 to vector<1x128xf32>
    %122 = arith.mulf %118, %121 : vector<1x128xf32>
    %123 = arith.mulf %120, %120 : vector<1x128xf32>
    %124 = arith.subf %122, %123 : vector<1x128xf32>
    %cst_44 = arith.constant 0.000000e+00 : f32
    %125 = vector.broadcast %cst_44 : f32 to vector<1x128xf32>
    %126 = arith.maximumf %124, %125 : vector<1x128xf32>
    %cst_45 = arith.constant 1.000000e-03 : f32
    %127 = vector.broadcast %cst_45 : f32 to vector<1x128xf32>
    %128 = arith.addf %126, %127 : vector<1x128xf32>
    %129 = math.rsqrt %128 : vector<1x128xf32>
    %130 = arith.mulf %106, %129 : vector<1x128xf32>
    %131 = arith.mulf %120, %130 : vector<1x128xf32>
    %132 = arith.subf %107, %131 : vector<1x128xf32>
    %133 = vector.broadcast %130 : vector<1x128xf32> to vector<64x128xf32>
    %134 = arith.mulf %105, %133 : vector<64x128xf32>
    %135 = vector.broadcast %132 : vector<1x128xf32> to vector<64x128xf32>
    %136 = arith.addf %134, %135 : vector<64x128xf32>
    %cst_46 = arith.constant 0.000000e+00 : f32
    %137 = vector.broadcast %cst_46 : f32 to vector<64x128xf32>
    %138 = arith.maximumf %136, %137 : vector<64x128xf32>
    %c19_i32_47 = arith.constant 19 : i32
    %139 = vector.broadcast %c19_i32_47 : i32 to vector<64x1xi32>
    %140 = arith.cmpi slt, %16, %139 : vector<64x1xi32>
    %141 = arith.extui %140 : vector<64x1xi1> to vector<64x1xi32>
    %142 = arith.sitofp %141 : vector<64x1xi32> to vector<64x1xf32>
    %143 = vector.broadcast %142 : vector<64x1xf32> to vector<64x128xf32>
    %144 = arith.mulf %138, %143 : vector<64x128xf32>
    %145 = vector.extract_strided_slice %144 {offsets = [0, 0], sizes = [32, 128], strides = [1, 1]} : vector<64x128xf32> to vector<32x128xf32>
    %cst_48 = arith.constant dense<0.000000e+00> : vector<128xf32>
    %146 = vector.multi_reduction <add>, %145, %cst_48 [0] : vector<32x128xf32> to vector<128xf32>
    %147 = vector.shape_cast %146 : vector<128xf32> to vector<1x128xf32>
    %cst_49 = arith.constant 0.0526315793 : f32
    %148 = vector.broadcast %cst_49 : f32 to vector<1x128xf32>
    %149 = arith.mulf %147, %148 : vector<1x128xf32>
    %150 = vector.extract_strided_slice %144 {offsets = [32, 0], sizes = [32, 128], strides = [1, 1]} : vector<64x128xf32> to vector<32x128xf32>
    %cst_50 = arith.constant dense<0.000000e+00> : vector<128xf32>
    %151 = vector.multi_reduction <add>, %150, %cst_50 [0] : vector<32x128xf32> to vector<128xf32>
    %152 = vector.shape_cast %151 : vector<128xf32> to vector<1x128xf32>
    %cst_51 = arith.constant 0.0526315793 : f32
    %153 = vector.broadcast %cst_51 : f32 to vector<1x128xf32>
    %154 = arith.mulf %152, %153 : vector<1x128xf32>
    %155 = tpu.concatenate %149, %154 in 0 : vector<1x128xf32>, vector<1x128xf32> -> vector<2x128xf32>
    %c0_52 = arith.constant 0 : index
    %c0_53 = arith.constant 0 : index
    %156 = vector.load %arg10[%c0_52, %c0_53] : memref<2x128xf32, #tpu.memory_space<vmem>>, vector<2x128xf32>
    tpu.vector_store %arg10[%c0_52, %c0_53], %155 {strides = array<i32>} : memref<2x128xf32, #tpu.memory_space<vmem>>, vector<2x128xf32>,
    return
  }
}

</mosaic_0001>

<llo_original>
// kernel: block_fcn_forward.1
$region0: #{block_fcn_forward.1}
  #allocation0 [shape = 'u32[]', space=smem, size = 0x4, offset = 0x4, fixed_abs, tag = 'smem constant byte address 0x4 - core index']
  #allocation1 [shape = 'u32[144,128]{1,0:T(1,128)}', space=vmem, size = 0x12000, scoped, tag = 'internal scratch']
  %s0 = inlined_call_operand.vmem [shape: bf16[64,128], index: 0, kind: input, shape index: {}]
  %s1 = inlined_call_operand.vmem [shape: bf16[128,128], index: 1, kind: input, shape index: {}]
  %s2 = inlined_call_operand.vmem [shape: f32[1,128], index: 2, kind: input, shape index: {}]
  %s3 = inlined_call_operand.vmem [shape: f32[1,128], index: 3, kind: input, shape index: {}]
  %s4 = inlined_call_operand.hbm [shape: bf16[640,256], index: 4, kind: input, shape index: {}]
  %s5 = inlined_call_operand.vmem [shape: f32[1,256], index: 5, kind: input, shape index: {}]
  %s6 = inlined_call_operand.vmem [shape: f32[1,256], index: 6, kind: input, shape index: {}]
  %s7 = inlined_call_operand.hbm [shape: bf16[768,128], index: 7, kind: input, shape index: {}]
  %s8 = inlined_call_operand.vmem [shape: f32[1,128], index: 8, kind: input, shape index: {}]
  %s9 = inlined_call_operand.vmem [shape: f32[1,128], index: 9, kind: input, shape index: {}]
  %s10 = inlined_call_operand.hbm [shape: f32[2,128], index: 10, kind: output, shape index: {}]
  %s11 = sld [smem:[#allocation0]]
  $region58: #{block_fcn_forward.1} parent=0
    _
  %s13 = ssub.s32 1, %s11
  %s14 = scalar_select 0, %s13, %s11
  $region1: #{block_fcn_forward.1} parent=0
    #allocation2 [shape = 'u8[327680]{0}', space=vmem, size = 0x50000, scoped, tag = 'input window, operand 4, single buffered']
    #allocation3 [shape = 's32[1]{0}', space=sflag, size = 0x4, scoped, tag = 'scoped memory for block_fcn_forward.1']
    #allocation4 [shape = 's32[1]{0}', space=sflag, size = 0x4, scoped, tag = 'scoped memory for block_fcn_forward.1']
    #allocation5 [shape = 'u8[196608]{0}', space=vmem, size = 0x30000, scoped, tag = 'input window, operand 7, single buffered']
    #allocation6 [shape = 's32[1]{0}', space=sflag, size = 0x4, scoped, tag = 'scoped memory for block_fcn_forward.1']
    #allocation7 [shape = 'u8[1024]{0}', space=vmem, size = 0x400, scoped, tag = 'output window, operand 0, single buffered']
    %15 = vsyncpa [#allocation3], 0
    %16 = vsyncpa [#allocation6], 0
    %17 = vsyncpa [#allocation4], 0
    // Predicated region
    $region2: #{block_fcn_forward.1} parent=1 // pred_check
      _
    $region3: #{block_fcn_forward.1} parent=1 // pred_check_branch
      %19 = sbr.rel (0) target = $region5
    $region4: #{block_fcn_forward.1} parent=1 // pred_region
      _
    $region5: #{block_fcn_forward.1} parent=1 // pred_fallthru
      _
    // Predicated region
    $region6: #{block_fcn_forward.1} parent=1 // pred_check
      _
    $region7: #{block_fcn_forward.1} parent=1 // pred_check_branch
      %21 = sbr.rel (0) target = $region9
    $region8: #{block_fcn_forward.1} parent=1 // pred_region
      _
    $region9: #{block_fcn_forward.1} parent=1 // pred_fallthru
      _
    // Predicated region
    $region10: #{block_fcn_forward.1} parent=1 // pred_check
      _
    $region11: #{block_fcn_forward.1} parent=1 // pred_check_branch
      %23 = sbr.rel (0) target = $region13
    $region12: #{block_fcn_forward.1} parent=1 // pred_region
      _
    $region13: #{block_fcn_forward.1} parent=1 // pred_fallthru
      _
    // Predicated region
    $region14: #{block_fcn_forward.1} parent=1 // pred_check
      _
    $region15: #{block_fcn_forward.1} parent=1 // pred_check_branch
      %25 = sbr.rel (0) target = $region17
    $region16: #{block_fcn_forward.1} parent=1 // pred_region
      _
    $region17: #{block_fcn_forward.1} parent=1 // pred_fallthru
      _
    // Predicated region
    $region18: #{block_fcn_forward.1} parent=1 // pred_check
      _
    $region19: #{block_fcn_forward.1} parent=1 // pred_check_branch
      %27 = sbr.rel (0) target = $region21
    $region20: #{block_fcn_forward.1} parent=1 // pred_region
      %s29 = ssub.s32 10240, 10240
      %30 = vsyncadd [#allocation3], %s29
      %s31 = sshll.u32 [#allocation2], 4
      %s32 = int_to_ptr.vmem [resolvable:$true] %s31
      %37 = dma.hbm_to_vmem [thread:$0]  %s4, 10240, %s32, [#allocation3], 128, 128, 8
    $region21: #{block_fcn_forward.1} parent=1 // pred_fallthru
      _
    // Predicated region
    $region22: #{block_fcn_forward.1} parent=1 // pred_check
      _
    $region23: #{block_fcn_forward.1} parent=1 // pred_check_branch
      %39 = sbr.rel (0) target = $region25
    $region24: #{block_fcn_forward.1} parent=1 // pred_region
      _
    $region25: #{block_fcn_forward.1} parent=1 // pred_fallthru
      _
    // Predicated region
    $region26: #{block_fcn_forward.1} parent=1 // pred_check
      _
    $region27: #{block_fcn_forward.1} parent=1 // pred_check_branch
      %41 = sbr.rel (0) target = $region29
    $region28: #{block_fcn_forward.1} parent=1 // pred_region
      _
    $region29: #{block_fcn_forward.1} parent=1 // pred_fallthru
      _
    // Predicated region
    $region30: #{block_fcn_forward.1} parent=1 // pred_check
      _
    $region31: #{block_fcn_forward.1} parent=1 // pred_check_branch
      %43 = sbr.rel (0) target = $region33
    $region32: #{block_fcn_forward.1} parent=1 // pred_region
      %s45 = ssub.s32 6144, 6144
      %46 = vsyncadd [#allocation6], %s45
      %s47 = sshll.u32 [#allocation5], 4
      %s48 = int_to_ptr.vmem [resolvable:$true] %s47
      %53 = dma.hbm_to_vmem [thread:$0]  %s7, 6144, %s48, [#allocation6], 64, 64, 4
    $region33: #{block_fcn_forward.1} parent=1 // pred_fallthru
      _
    // Predicated region
    $region34: #{block_fcn_forward.1} parent=1 // pred_check
      _
    $region35: #{block_fcn_forward.1} parent=1 // pred_check_branch
      %55 = sbr.rel (0) target = $region37
    $region36: #{block_fcn_forward.1} parent=1 // pred_region
      _
    $region37: #{block_fcn_forward.1} parent=1 // pred_fallthru
      _
    // Predicated region
    $region38: #{block_fcn_forward.1} parent=1 // pred_check
      _
    $region39: #{block_fcn_forward.1} parent=1 // pred_check_branch
      %57 = sbr.rel (0) target = $region41
    $region40: #{block_fcn_forward.1} parent=1 // pred_region
      _
    $region41: #{block_fcn_forward.1} parent=1 // pred_fallthru
      _
    // Predicated region
    $region42: #{block_fcn_forward.1} parent=1 // pred_check
      _
    $region43: #{block_fcn_forward.1} parent=1 // pred_check_branch
      %59 = sbr.rel (0) target = $region45
    $region44: #{block_fcn_forward.1} parent=1 // pred_region
      %60 = dma.done [#allocation3], 10240
    $region45: #{block_fcn_forward.1} parent=1 // pred_fallthru
      _
    // Predicated region
    $region46: #{block_fcn_forward.1} parent=1 // pred_check
      _
    $region47: #{block_fcn_forward.1} parent=1 // pred_check_branch
      %62 = sbr.rel (0) target = $region49
    $region48: #{block_fcn_forward.1} parent=1 // pred_region
      %63 = dma.done [#allocation6], 6144
    $region49: #{block_fcn_forward.1} parent=1 // pred_fallthru
      _
    %v65 = vlaneseq
    %v66 = vshrl.u32 %v65, 7
    %v67 = vadd.s32 %v66, 8
    %v68 = vadd.s32 %v66, 16
    %v69 = vadd.s32 %v66, 24
    %v70 = vadd.s32 %v66, 32
    %v71 = vadd.s32 %v66, 40
    %v72 = vadd.s32 %v66, 48
    %v73 = vadd.s32 %v66, 56
    %vm74 = vcmp.lt.s32.totalorder %v66, 0
    %v75 = vsub.s32 0, %v66
    %v76 = vsel %vm74, %v75, %v66
    %v77 = vshrl.u32 %v76, 5
    %v78 = vand.u32 %v76, 31
    %v79 = vsub.s32 0, %v78
    %v80 = vsel %vm74, %v79, %v78
    %vm81 = vcmp.lt.s32.totalorder %v67, 0
    %v82 = vsub.s32 0, %v67
    %v83 = vsel %vm81, %v82, %v67
    %v84 = vshrl.u32 %v83, 5
    %v85 = vand.u32 %v83, 31
    %v86 = vsub.s32 0, %v85
    %v87 = vsel %vm81, %v86, %v85
    %vm88 = vcmp.lt.s32.totalorder %v68, 0
    %v89 = vsub.s32 0, %v68
    %v90 = vsel %vm88, %v89, %v68
    %v91 = vshrl.u32 %v90, 5
    %v92 = vand.u32 %v90, 31
    %v93 = vsub.s32 0, %v92
    %v94 = vsel %vm88, %v93, %v92
    %vm95 = vcmp.lt.s32.totalorder %v69, 0
    %v96 = vsub.s32 0, %v69
    %v97 = vsel %vm95, %v96, %v69
    %v98 = vshrl.u32 %v97, 5
    %v99 = vand.u32 %v97, 31
    %v100 = vsub.s32 0, %v99
    %v101 = vsel %vm95, %v100, %v99
    %vm102 = vcmp.lt.s32.totalorder %v70, 0
    %v103 = vsub.s32 0, %v70
    %v104 = vsel %vm102, %v103, %v70
    %v105 = vshrl.u32 %v104, 5
    %v106 = vand.u32 %v104, 31
    %v107 = vsub.s32 0, %v106
    %v108 = vsel %vm102, %v107, %v106
    %vm109 = vcmp.lt.s32.totalorder %v71, 0
    %v110 = vsub.s32 0, %v71
    %v111 = vsel %vm109, %v110, %v71
    %v112 = vshrl.u32 %v111, 5
    %v113 = vand.u32 %v111, 31
    %v114 = vsub.s32 0, %v113
    %v115 = vsel %vm109, %v114, %v113
    %vm116 = vcmp.lt.s32.totalorder %v72, 0
    %v117 = vsub.s32 0, %v72
    %v118 = vsel %vm116, %v117, %v72
    %v119 = vshrl.u32 %v118, 5
    %v120 = vand.u32 %v118, 31
    %v121 = vsub.s32 0, %v120
    %v122 = vsel %vm116, %v121, %v120
    %vm123 = vcmp.lt.s32.totalorder %v73, 0
    %v124 = vsub.s32 0, %v73
    %v125 = vsel %vm123, %v124, %v73
    %v126 = vshrl.u32 %v125, 5
    %v127 = vand.u32 %v125, 31
    %v128 = vsub.s32 0, %v127
    %v129 = vsel %vm123, %v128, %v127
    %vm130 = vcmp.ne.s32.totalorder %v80, 0
    %vm131 = vcmp.ne.s32.totalorder %v87, 0
    %vm132 = vcmp.ne.s32.totalorder %v94, 0
    %vm133 = vcmp.ne.s32.totalorder %v101, 0
    %vm134 = vcmp.ne.s32.totalorder %v108, 0
    %vm135 = vcmp.ne.s32.totalorder %v115, 0
    %vm136 = vcmp.ne.s32.totalorder %v122, 0
    %vm137 = vcmp.ne.s32.totalorder %v129, 0
    %vm138 = vcmp.lt.s32.totalorder %v80, 0
    %vm139 = vcmp.lt.s32.totalorder %v87, 0
    %vm140 = vcmp.lt.s32.totalorder %v94, 0
    %vm141 = vcmp.lt.s32.totalorder %v101, 0
    %vm142 = vcmp.lt.s32.totalorder %v108, 0
    %vm143 = vcmp.lt.s32.totalorder %v115, 0
    %vm144 = vcmp.lt.s32.totalorder %v122, 0
    %vm145 = vcmp.lt.s32.totalorder %v129, 0
    %vm146 = vmand %vm138, %vm130
    %vm147 = vmand %vm139, %vm131
    %vm148 = vmand %vm140, %vm132
    %vm149 = vmand %vm141, %vm133
    %vm150 = vmand %vm142, %vm134
    %vm151 = vmand %vm143, %vm135
    %vm152 = vmand %vm144, %vm136
    %vm153 = vmand %vm145, %vm137
    %v154 = vadd.s32 %v80, 32
    %v155 = vadd.s32 %v87, 32
    %v156 = vadd.s32 %v94, 32
    %v157 = vadd.s32 %v101, 32
    %v158 = vadd.s32 %v108, 32
    %v159 = vadd.s32 %v115, 32
    %v160 = vadd.s32 %v122, 32
    %v161 = vadd.s32 %v129, 32
    %v162 = vsel %vm146, %v154, %v80
    %v163 = vsel %vm147, %v155, %v87
    %v164 = vsel %vm148, %v156, %v94
    %v165 = vsel %vm149, %v157, %v101
    %v166 = vsel %vm150, %v158, %v108
    %v167 = vsel %vm151, %v159, %v115
    %v168 = vsel %vm152, %v160, %v122
    %v169 = vsel %vm153, %v161, %v129
    %v170 = vld [vmem:[%s0] sm:$0xf]
    %v171 = vld [vmem:[%s0 + $0x4] sm:$0xf]
    %v172 = vld [vmem:[%s0 + $0x8] sm:$0xf]
    %v173 = vld [vmem:[%s0 + $0xc] sm:$0xf]
    %v174 = vld [vmem:[%s0 + $0x10] sm:$0xf]
    %v175 = vld [vmem:[%s0 + $0x14] sm:$0xf]
    %v176 = vld [vmem:[%s0 + $0x18] sm:$0xf]
    %v177 = vld [vmem:[%s0 + $0x1c] sm:$0xf]
    %v178 = vld [vmem:[%s1] sm:$0xf]
    %v179 = vld [vmem:[%s1 + $0x4] sm:$0xf]
    %v180 = vld [vmem:[%s1 + $0x8] sm:$0xf]
    %v181 = vld [vmem:[%s1 + $0xc] sm:$0xf]
    %v182 = vld [vmem:[%s1 + $0x10] sm:$0xf]
    %v183 = vld [vmem:[%s1 + $0x14] sm:$0xf]
    %v184 = vld [vmem:[%s1 + $0x18] sm:$0xf]
    %v185 = vld [vmem:[%s1 + $0x1c] sm:$0xf]
    %v186 = vld [vmem:[%s1 + $0x20] sm:$0xf]
    %v187 = vld [vmem:[%s1 + $0x24] sm:$0xf]
    %v188 = vld [vmem:[%s1 + $0x28] sm:$0xf]
    %v189 = vld [vmem:[%s1 + $0x2c] sm:$0xf]
    %v190 = vld [vmem:[%s1 + $0x30] sm:$0xf]
    %v191 = vld [vmem:[%s1 + $0x34] sm:$0xf]
    %v192 = vld [vmem:[%s1 + $0x38] sm:$0xf]
    %v193 = vld [vmem:[%s1 + $0x3c] sm:$0xf]
    %v202 = vunpack.c.l.b16 %v170
    %v203 = vunpack.c.l.b16 %v171
    %v204 = vunpack.c.l.b16 %v172
    %v205 = vunpack.c.l.b16 %v173
    %v206 = vunpack.c.l.b16 %v174
    %v207 = vunpack.c.l.b16 %v175
    %v208 = vunpack.c.l.b16 %v176
    %v209 = vunpack.c.l.b16 %v177
    %v210 = vpack.c.b16 %v203, %v202
    %v211 = vpack.c.b16 %v205, %v204
    %v212 = vpack.c.b16 %v207, %v206
    %v213 = vpack.c.b16 %v209, %v208
    %v234 = vunpack.c.l.b16 %v178
    %v235 = vunpack.c.l.b16 %v179
    %v236 = vunpack.c.l.b16 %v180
    %v237 = vunpack.c.l.b16 %v181
    %v238 = vunpack.c.l.b16 %v182
    %v239 = vunpack.c.l.b16 %v183
    %v240 = vunpack.c.l.b16 %v184
    %v241 = vunpack.c.l.b16 %v185
    %v242 = vunpack.c.l.b16 %v186
    %v243 = vunpack.c.l.b16 %v187
    %v244 = vunpack.c.l.b16 %v188
    %v245 = vunpack.c.l.b16 %v189
    %v246 = vunpack.c.l.b16 %v190
    %v247 = vunpack.c.l.b16 %v191
    %v248 = vunpack.c.l.b16 %v192
    %v249 = vunpack.c.l.b16 %v193
    %v250 = vpack.c.b16 %v235, %v234
    %v251 = vpack.c.b16 %v237, %v236
    %v252 = vpack.c.b16 %v239, %v238
    %v253 = vpack.c.b16 %v241, %v240
    %v254 = vpack.c.b16 %v243, %v242
    %v255 = vpack.c.b16 %v245, %v244
    %v256 = vpack.c.b16 %v247, %v246
    %v257 = vpack.c.b16 %v249, %v248
    %266 = vmatprep.subr.bf16.mxu0 0
    %267 = vmatpush1.bf16.msra.mxu0 %v250
    %268 = vmatprep.subr.bf16.mxu0 0
    %269 = vmatpush1.bf16.msra.mxu0 %v251
    %270 = vmatprep.subr.bf16.mxu0 0
    %271 = vmatpush1.bf16.msra.mxu0 %v252
    %272 = vmatprep.subr.bf16.mxu0 0
    %273 = vmatpush1.bf16.msra.mxu0 %v253
    %274 = vmatprep.subr.bf16.mxu0 0
    %275 = vmatpush1.bf16.msra.mxu0 %v254
    %276 = vmatprep.subr.bf16.mxu0 0
    %277 = vmatpush1.bf16.msra.mxu0 %v255
    %278 = vmatprep.subr.bf16.mxu0 0
    %279 = vmatpush1.bf16.msra.mxu0 %v256
    %280 = vmatprep.subr.bf16.mxu0 0
    %281 = vmatpush1.bf16.msra.mxu0 %v257
    %282 = vmatprep.subr.bf16.mxu0 0
    %283 = vmatpush1.bf16.msra.mxu0 0
    %284 = vmatprep.subr.bf16.mxu0 0
    %285 = vmatpush1.bf16.msra.mxu0 0
    %286 = vmatprep.subr.bf16.mxu0 0
    %287 = vmatpush1.bf16.msra.mxu0 0
    %288 = vmatprep.subr.bf16.mxu0 0
    %289 = vmatpush1.bf16.msra.mxu0 0
    %290 = vmatprep.subr.bf16.mxu0 0
    %291 = vmatpush1.bf16.msra.mxu0 0
    %292 = vmatprep.subr.bf16.mxu0 0
    %293 = vmatpush1.bf16.msra.mxu0 0
    %294 = vmatprep.subr.bf16.mxu0 0
    %295 = vmatpush1.bf16.msra.mxu0 0
    %296 = vmatprep.subr.bf16.mxu0 0
    %297 = vmatpush1.bf16.msra.mxu0 0
    %298 = vmatprep.mubr.bf16.mxu0 0
    %299 = vmatmul.mubr.bf16.gmra.mrb[0].mxu0 %v210
    %v300 = vpop.f32.mrb[0].mxu0
    %v301 = vadd.f32 0.0, %v300
    %v302 = vpop.f32.mrb[0].mxu0
    %v303 = vpop.f32.mrb[0].mxu0
    %v304 = vadd.f32 0.0, %v303
    %v305 = vpop.f32.mrb[0].mxu0
    %306 = vmatprep.mubr.bf16.mxu0 0
    %307 = vmatmul.mubr.bf16.gmra.mrb[0].mxu0 %v211
    %v308 = vpop.f32.mrb[0].mxu0
    %v309 = vadd.f32 0.0, %v308
    %v310 = vpop.f32.mrb[0].mxu0
    %v311 = vpop.f32.mrb[0].mxu0
    %v312 = vadd.f32 0.0, %v311
    %v313 = vpop.f32.mrb[0].mxu0
    %314 = vmatprep.mubr.bf16.mxu0 0
    %315 = vmatmul.mubr.bf16.gmra.mrb[0].mxu0 %v212
    %v316 = vpop.f32.mrb[0].mxu0
    %v317 = vadd.f32 0.0, %v316
    %v318 = vpop.f32.mrb[0].mxu0
    %v319 = vpop.f32.mrb[0].mxu0
    %v320 = vadd.f32 0.0, %v319
    %v321 = vpop.f32.mrb[0].mxu0
    %322 = vmatprep.mubr.bf16.mxu0 0
    %323 = vmatmul.mubr.bf16.gmra.mrb[0].mxu0 %v213
    %v324 = vpop.f32.mrb[0].mxu0
    %v325 = vadd.f32 0.0, %v324
    %v326 = vpop.f32.mrb[0].mxu0
    %v327 = vpop.f32.mrb[0].mxu0
    %v328 = vadd.f32 0.0, %v327
    %v329 = vpop.f32.mrb[0].mxu0
    %330 = vdwg.mxu0
    %v331 = vld [vmem:[%s2] sm:$0x1]
    %v332 = vld [vmem:[%s3] sm:$0x1]
    %vm333 = vcmp.lt.s32.totalorder %v162, 25
    %vm334 = vcmp.lt.s32.totalorder %v163, 25
    %vm335 = vcmp.lt.s32.totalorder %v164, 25
    %vm336 = vcmp.lt.s32.totalorder %v165, 25
    %vm337 = vcmp.lt.s32.totalorder %v166, 25
    %vm338 = vcmp.lt.s32.totalorder %v167, 25
    %vm339 = vcmp.lt.s32.totalorder %v168, 25
    %vm340 = vcmp.lt.s32.totalorder %v169, 25
    %v341 = vsel %vm333, 1, 0
    %v342 = vsel %vm334, 1, 0
    %v343 = vsel %vm335, 1, 0
    %v344 = vsel %vm336, 1, 0
    %v345 = vsel %vm337, 1, 0
    %v346 = vsel %vm338, 1, 0
    %v347 = vsel %vm339, 1, 0
    %v348 = vsel %vm340, 1, 0
    %v349 = vcvt.s32.f32 %v341
    %v350 = vcvt.s32.f32 %v342
    %v351 = vcvt.s32.f32 %v343
    %v352 = vcvt.s32.f32 %v344
    %v353 = vcvt.s32.f32 %v345
    %v354 = vcvt.s32.f32 %v346
    %v355 = vcvt.s32.f32 %v347
    %v356 = vcvt.s32.f32 %v348
    %v357 = vmul.f32 %v301, %v349
    %v358 = vmul.f32 %v304, %v350
    %v359 = vmul.f32 %v309, %v351
    %v360 = vmul.f32 %v312, %v352
    %v361 = vmul.f32 %v317, %v353
    %v362 = vmul.f32 %v320, %v354
    %v363 = vmul.f32 %v325, %v355
    %v364 = vmul.f32 %v328, %v356
    %v365 = vadd.f32 %v357, %v358
    %v366 = vadd.f32 %v365, %v359
    %v367 = vadd.f32 %v366, %v360
    %v368 = vadd.f32 %v367, %v361
    %v369 = vadd.f32 %v368, %v362
    %v370 = vadd.f32 %v369, %v363
    %v371 = vadd.f32 %v370, %v364
    %v372 = vrot.slane %v371, 4
    %v373 = vadd.f32 %v371, %v372
    %v374 = vrot.slane %v373, 2
    %v375 = vadd.f32 %v373, %v374
    %v376 = vrot.slane %v375, 1
    %v377 = vadd.f32 %v375, %v376
    %v378 = vmul.f32 %v357, %v357
    %v379 = vmul.f32 %v358, %v358
    %v380 = vmul.f32 %v359, %v359
    %v381 = vmul.f32 %v360, %v360
    %v382 = vmul.f32 %v361, %v361
    %v383 = vmul.f32 %v362, %v362
    %v384 = vmul.f32 %v363, %v363
    %v385 = vmul.f32 %v364, %v364
    %v386 = vadd.f32 %v378, %v379
    %v387 = vadd.f32 %v386, %v380
    %v388 = vadd.f32 %v387, %v381
    %v389 = vadd.f32 %v388, %v382
    %v390 = vadd.f32 %v389, %v383
    %v391 = vadd.f32 %v390, %v384
    %v392 = vadd.f32 %v391, %v385
    %v393 = vrot.slane %v392, 4
    %v394 = vadd.f32 %v392, %v393
    %v395 = vrot.slane %v394, 2
    %v396 = vadd.f32 %v394, %v395
    %v397 = vrot.slane %v396, 1
    %v398 = vadd.f32 %v396, %v397
    %v399 = vmul.f32 %v377, 0.02
    %v400 = vmul.f32 %v398, 0.02
    %v401 = vmul.f32 %v399, %v399
    %v402 = vsub.f32 %v400, %v401
    %v403 = vmax.f32 %v402, 0.0
    %v404 = vadd.f32 %v403, 0.001
    %v405 = vrsqrt.pop %v404
    %v406 = vmul.f32 %v331, %v405
    %v407 = vmul.f32 %v399, %v406
    %v408 = vsub.f32 %v332, %v407
    %v410 = vlaneseq
    %v411 = vshrl.u32 %v410, 7
    %v412 = vsub.s32 0, %v411
    %v413 = vrot.slane %v406, %v412
    %v415 = vmul.f32 %v301, %v413
    %v416 = vmul.f32 %v304, %v413
    %v417 = vmul.f32 %v309, %v413
    %v418 = vmul.f32 %v312, %v413
    %v419 = vmul.f32 %v317, %v413
    %v420 = vmul.f32 %v320, %v413
    %v421 = vmul.f32 %v325, %v413
    %v422 = vmul.f32 %v328, %v413
    %v424 = vlaneseq
    %v425 = vshrl.u32 %v424, 7
    %v426 = vsub.s32 0, %v425
    %v427 = vrot.slane %v408, %v426
    %v429 = vadd.f32 %v415, %v427
    %v430 = vadd.f32 %v416, %v427
    %v431 = vadd.f32 %v417, %v427
    %v432 = vadd.f32 %v418, %v427
    %v433 = vadd.f32 %v419, %v427
    %v434 = vadd.f32 %v420, %v427
    %v435 = vadd.f32 %v421, %v427
    %v436 = vadd.f32 %v422, %v427
    %v437 = vmax.f32 %v429, 0.0
    %v438 = vmax.f32 %v430, 0.0
    %v439 = vmax.f32 %v431, 0.0
    %v440 = vmax.f32 %v432, 0.0
    %v441 = vmax.f32 %v433, 0.0
    %v442 = vmax.f32 %v434, 0.0
    %v443 = vmax.f32 %v435, 0.0
    %v444 = vmax.f32 %v436, 0.0
    %v445 = vpack.c.bf16 %v438, %v437
    %v446 = vpack.c.bf16 %v440, %v439
    %v447 = vpack.c.bf16 %v442, %v441
    %v448 = vpack.c.bf16 %v444, %v443
    %v449 = vrot.slane %v437, 1
    %v450 = vrot.slane %v438, 1
    %v451 = vrot.slane %v439, 1
    %v452 = vrot.slane %v440, 1
    %v453 = vrot.slane %v441, 1
    %v454 = vrot.slane %v442, 1
    %v455 = vrot.slane %v443, 1
    %v456 = vrot.slane %v444, 1
    %vm457 = vcmp.lt.s32.totalorder %v66, 7
    %v458 = vsel %vm457, %v455, %v456
    %v459 = vsel %vm457, %v454, %v455
    %v460 = vsel %vm457, %v453, %v454
    %v461 = vsel %vm457, %v452, %v453
    %v462 = vsel %vm457, %v451, %v452
    %v463 = vsel %vm457, %v450, %v451
    %v464 = vsel %vm457, %v449, %v450
    %v465 = vsel %vm457, %v456, %v449
    %v466 = vpack.c.bf16 %v463, %v464
    %v467 = vpack.c.bf16 %v461, %v462
    %v468 = vpack.c.bf16 %v459, %v460
    %v469 = vpack.c.bf16 %v465, %v458
    %v470 = vrot.slane %v437, 2
    %v471 = vrot.slane %v438, 2
    %v472 = vrot.slane %v439, 2
    %v473 = vrot.slane %v440, 2
    %v474 = vrot.slane %v441, 2
    %v475 = vrot.slane %v442, 2
    %v476 = vrot.slane %v443, 2
    %v477 = vrot.slane %v444, 2
    %vm478 = vcmp.lt.s32.totalorder %v66, 6
    %v479 = vsel %vm478, %v476, %v477
    %v480 = vsel %vm478, %v475, %v476
    %v481 = vsel %vm478, %v474, %v475
    %v482 = vsel %vm478, %v473, %v474
    %v483 = vsel %vm478, %v472, %v473
    %v484 = vsel %vm478, %v471, %v472
    %v485 = vsel %vm478, %v470, %v471
    %v486 = vsel %vm478, %v477, %v470
    %v487 = vpack.c.bf16 %v484, %v485
    %v488 = vpack.c.bf16 %v482, %v483
    %v489 = vpack.c.bf16 %v480, %v481
    %v490 = vpack.c.bf16 %v486, %v479
    %v491 = vrot.slane %v437, 3
    %v492 = vrot.slane %v438, 3
    %v493 = vrot.slane %v439, 3
    %v494 = vrot.slane %v440, 3
    %v495 = vrot.slane %v441, 3
    %v496 = vrot.slane %v442, 3
    %v497 = vrot.slane %v443, 3
    %v498 = vrot.slane %v444, 3
    %vm499 = vcmp.lt.s32.totalorder %v66, 5
    %v500 = vsel %vm499, %v497, %v498
    %v501 = vsel %vm499, %v496, %v497
    %v502 = vsel %vm499, %v495, %v496
    %v503 = vsel %vm499, %v494, %v495
    %v504 = vsel %vm499, %v493, %v494
    %v505 = vsel %vm499, %v492, %v493
    %v506 = vsel %vm499, %v491, %v492
    %v507 = vsel %vm499, %v498, %v491
    %v508 = vpack.c.bf16 %v505, %v506
    %v509 = vpack.c.bf16 %v503, %v504
    %v510 = vpack.c.bf16 %v501, %v502
    %v511 = vpack.c.bf16 %v507, %v500
    %v512 = vrot.slane %v437, 4
    %v513 = vrot.slane %v438, 4
    %v514 = vrot.slane %v439, 4
    %v515 = vrot.slane %v440, 4
    %v516 = vrot.slane %v441, 4
    %v517 = vrot.slane %v442, 4
    %v518 = vrot.slane %v443, 4
    %v519 = vrot.slane %v444, 4
    %vm520 = vcmp.lt.s32.totalorder %v66, 4
    %v521 = vsel %vm520, %v518, %v519
    %v522 = vsel %vm520, %v517, %v518
    %v523 = vsel %vm520, %v516, %v517
    %v524 = vsel %vm520, %v515, %v516
    %v525 = vsel %vm520, %v514, %v515
    %v526 = vsel %vm520, %v513, %v514
    %v527 = vsel %vm520, %v512, %v513
    %v528 = vsel %vm520, %v519, %v512
    %v529 = vpack.c.bf16 %v526, %v527
    %v530 = vpack.c.bf16 %v524, %v525
    %v531 = vpack.c.bf16 %v522, %v523
    %v532 = vpack.c.bf16 %v528, %v521
    %v533 = vld [vmem:[#allocation2] sm:$0xff]
    %v534 = vld [vmem:[#allocation2 + $0x8] sm:$0xff]
    %v535 = vld [vmem:[#allocation2 + $0x10] sm:$0xff]
    %v536 = vld [vmem:[#allocation2 + $0x18] sm:$0xff]
    %v537 = vld [vmem:[#allocation2 + $0x20] sm:$0xff]
    %v538 = vld [vmem:[#allocation2 + $0x28] sm:$0xff]
    %v539 = vld [vmem:[#allocation2 + $0x30] sm:$0xff]
    %v540 = vld [vmem:[#allocation2 + $0x38] sm:$0xff]
    %v541 = vld [vmem:[#allocation2 + $0x40] sm:$0xff]
    %v542 = vld [vmem:[#allocation2 + $0x48] sm:$0xff]
    %v543 = vld [vmem:[#allocation2 + $0x50] sm:$0xff]
    %v544 = vld [vmem:[#allocation2 + $0x58] sm:$0xff]
    %v545 = vld [vmem:[#allocation2 + $0x60] sm:$0xff]
    %v546 = vld [vmem:[#allocation2 + $0x68] sm:$0xff]
    %v547 = vld [vmem:[#allocation2 + $0x70] sm:$0xff]
    %v548 = vld [vmem:[#allocation2 + $0x78] sm:$0xff]
    %v549 = vld [vmem:[#allocation2 + $0x80] sm:$0xff]
    %v550 = vld [vmem:[#allocation2 + $0x88] sm:$0xff]
    %v551 = vld [vmem:[#allocation2 + $0x90] sm:$0xff]
    %v552 = vld [vmem:[#allocation2 + $0x98] sm:$0xff]
    %v553 = vld [vmem:[#allocation2 + $0xa0] sm:$0xff]
    %v554 = vld [vmem:[#allocation2 + $0xa8] sm:$0xff]
    %v555 = vld [vmem:[#allocation2 + $0xb0] sm:$0xff]
    %v556 = vld [vmem:[#allocation2 + $0xb8] sm:$0xff]
    %v557 = vld [vmem:[#allocation2 + $0xc0] sm:$0xff]
    %v558 = vld [vmem:[#allocation2 + $0xc8] sm:$0xff]
    %v559 = vld [vmem:[#allocation2 + $0xd0] sm:$0xff]
    %v560 = vld [vmem:[#allocation2 + $0xd8] sm:$0xff]
    %v561 = vld [vmem:[#allocation2 + $0xe0] sm:$0xff]
    %v562 = vld [vmem:[#allocation2 + $0xe8] sm:$0xff]
    %v563 = vld [vmem:[#allocation2 + $0xf0] sm:$0xff]
    %v564 = vld [vmem:[#allocation2 + $0xf8] sm:$0xff]
    %v565 = vld [vmem:[#allocation2 + $0x100] sm:$0xff]
    %v566 = vld [vmem:[#allocation2 + $0x108] sm:$0xff]
    %v567 = vld [vmem:[#allocation2 + $0x110] sm:$0xff]
    %v568 = vld [vmem:[#allocation2 + $0x118] sm:$0xff]
    %v569 = vld [vmem:[#allocation2 + $0x120] sm:$0xff]
    %v570 = vld [vmem:[#allocation2 + $0x128] sm:$0xff]
    %v571 = vld [vmem:[#allocation2 + $0x130] sm:$0xff]
    %v572 = vld [vmem:[#allocation2 + $0x138] sm:$0xff]
    %v573 = vld [vmem:[#allocation2 + $0x140] sm:$0xff]
    %v574 = vld [vmem:[#allocation2 + $0x148] sm:$0xff]
    %v575 = vld [vmem:[#allocation2 + $0x150] sm:$0xff]
    %v576 = vld [vmem:[#allocation2 + $0x158] sm:$0xff]
    %v577 = vld [vmem:[#allocation2 + $0x160] sm:$0xff]
    %v578 = vld [vmem:[#allocation2 + $0x168] sm:$0xff]
    %v579 = vld [vmem:[#allocation2 + $0x170] sm:$0xff]
    %v580 = vld [vmem:[#allocation2 + $0x178] sm:$0xff]
    %v581 = vld [vmem:[#allocation2 + $0x180] sm:$0xff]
    %v582 = vld [vmem:[#allocation2 + $0x188] sm:$0xff]
    %v583 = vld [vmem:[#allocation2 + $0x190] sm:$0xff]
    %v584 = vld [vmem:[#allocation2 + $0x198] sm:$0xff]
    %v585 = vld [vmem:[#allocation2 + $0x1a0] sm:$0xff]
    %v586 = vld [vmem:[#allocation2 + $0x1a8] sm:$0xff]
    %v587 = vld [vmem:[#allocation2 + $0x1b0] sm:$0xff]
    %v588 = vld [vmem:[#allocation2 + $0x1b8] sm:$0xff]
    %v589 = vld [vmem:[#allocation2 + $0x1c0] sm:$0xff]
    %v590 = vld [vmem:[#allocation2 + $0x1c8] sm:$0xff]
    %v591 = vld [vmem:[#allocation2 + $0x1d0] sm:$0xff]
    %v592 = vld [vmem:[#allocation2 + $0x1d8] sm:$0xff]
    %v593 = vld [vmem:[#allocation2 + $0x1e0] sm:$0xff]
    %v594 = vld [vmem:[#allocation2 + $0x1e8] sm:$0xff]
    %v595 = vld [vmem:[#allocation2 + $0x1f0] sm:$0xff]
    %v596 = vld [vmem:[#allocation2 + $0x1f8] sm:$0xff]
    %v597 = vld [vmem:[#allocation2 + $0x200] sm:$0xff]
    %v598 = vld [vmem:[#allocation2 + $0x208] sm:$0xff]
    %v599 = vld [vmem:[#allocation2 + $0x210] sm:$0xff]
    %v600 = vld [vmem:[#allocation2 + $0x218] sm:$0xff]
    %v601 = vld [vmem:[#allocation2 + $0x220] sm:$0xff]
    %v602 = vld [vmem:[#allocation2 + $0x228] sm:$0xff]
    %v603 = vld [vmem:[#allocation2 + $0x230] sm:$0xff]
    %v604 = vld [vmem:[#allocation2 + $0x238] sm:$0xff]
    %v605 = vld [vmem:[#allocation2 + $0x240] sm:$0xff]
    %v606 = vld [vmem:[#allocation2 + $0x248] sm:$0xff]
    %v607 = vld [vmem:[#allocation2 + $0x250] sm:$0xff]
    %v608 = vld [vmem:[#allocation2 + $0x258] sm:$0xff]
    %v609 = vld [vmem:[#allocation2 + $0x260] sm:$0xff]
    %v610 = vld [vmem:[#allocation2 + $0x268] sm:$0xff]
    %v611 = vld [vmem:[#allocation2 + $0x270] sm:$0xff]
    %v612 = vld [vmem:[#allocation2 + $0x278] sm:$0xff]
    %v693 = vunpack.c.l.b16 %v533
    %v694 = vunpack.c.h.b16 %v533
    %v695 = vunpack.c.l.b16 %v534
    %v696 = vunpack.c.h.b16 %v534
    %v697 = vunpack.c.l.b16 %v535
    %v698 = vunpack.c.h.b16 %v535
    %v699 = vunpack.c.l.b16 %v536
    %v700 = vunpack.c.h.b16 %v536
    %v701 = vunpack.c.l.b16 %v537
    %v702 = vunpack.c.h.b16 %v537
    %v703 = vunpack.c.l.b16 %v538
    %v704 = vunpack.c.h.b16 %v538
    %v705 = vunpack.c.l.b16 %v539
    %v706 = vunpack.c.h.b16 %v539
    %v707 = vunpack.c.l.b16 %v540
    %v708 = vunpack.c.h.b16 %v540
    %v709 = vunpack.c.l.b16 %v541
    %v710 = vunpack.c.h.b16 %v541
    %v711 = vunpack.c.l.b16 %v542
    %v712 = vunpack.c.h.b16 %v542
    %v713 = vunpack.c.l.b16 %v543
    %v714 = vunpack.c.h.b16 %v543
    %v715 = vunpack.c.l.b16 %v544
    %v716 = vunpack.c.h.b16 %v544
    %v717 = vunpack.c.l.b16 %v545
    %v718 = vunpack.c.h.b16 %v545
    %v719 = vunpack.c.l.b16 %v546
    %v720 = vunpack.c.h.b16 %v546
    %v721 = vunpack.c.l.b16 %v547
    %v722 = vunpack.c.h.b16 %v547
    %v723 = vunpack.c.l.b16 %v548
    %v724 = vunpack.c.h.b16 %v548
    %v725 = vunpack.c.l.b16 %v549
    %v726 = vunpack.c.h.b16 %v549
    %v727 = vunpack.c.l.b16 %v550
    %v728 = vunpack.c.h.b16 %v550
    %v729 = vunpack.c.l.b16 %v551
    %v730 = vunpack.c.h.b16 %v551
    %v731 = vunpack.c.l.b16 %v552
    %v732 = vunpack.c.h.b16 %v552
    %v733 = vunpack.c.l.b16 %v553
    %v734 = vunpack.c.h.b16 %v553
    %v735 = vunpack.c.l.b16 %v554
    %v736 = vunpack.c.h.b16 %v554
    %v737 = vunpack.c.l.b16 %v555
    %v738 = vunpack.c.h.b16 %v555
    %v739 = vunpack.c.l.b16 %v556
    %v740 = vunpack.c.h.b16 %v556
    %v741 = vunpack.c.l.b16 %v557
    %v742 = vunpack.c.h.b16 %v557
    %v743 = vunpack.c.l.b16 %v558
    %v744 = vunpack.c.h.b16 %v558
    %v745 = vunpack.c.l.b16 %v559
    %v746 = vunpack.c.h.b16 %v559
    %v747 = vunpack.c.l.b16 %v560
    %v748 = vunpack.c.h.b16 %v560
    %v749 = vunpack.c.l.b16 %v561
    %v750 = vunpack.c.h.b16 %v561
    %v751 = vunpack.c.l.b16 %v562
    %v752 = vunpack.c.h.b16 %v562
    %v753 = vunpack.c.l.b16 %v563
    %v754 = vunpack.c.h.b16 %v563
    %v755 = vunpack.c.l.b16 %v564
    %v756 = vunpack.c.h.b16 %v564
    %v757 = vunpack.c.l.b16 %v565
    %v758 = vunpack.c.h.b16 %v565
    %v759 = vunpack.c.l.b16 %v566
    %v760 = vunpack.c.h.b16 %v566
    %v761 = vunpack.c.l.b16 %v567
    %v762 = vunpack.c.h.b16 %v567
    %v763 = vunpack.c.l.b16 %v568
    %v764 = vunpack.c.h.b16 %v568
    %v765 = vunpack.c.l.b16 %v569
    %v766 = vunpack.c.h.b16 %v569
    %v767 = vunpack.c.l.b16 %v570
    %v768 = vunpack.c.h.b16 %v570
    %v769 = vunpack.c.l.b16 %v571
    %v770 = vunpack.c.h.b16 %v571
    %v771 = vunpack.c.l.b16 %v572
    %v772 = vunpack.c.h.b16 %v572
    %v773 = vunpack.c.l.b16 %v573
    %v774 = vunpack.c.h.b16 %v573
    %v775 = vunpack.c.l.b16 %v574
    %v776 = vunpack.c.h.b16 %v574
    %v777 = vunpack.c.l.b16 %v575
    %v778 = vunpack.c.h.b16 %v575
    %v779 = vunpack.c.l.b16 %v576
    %v780 = vunpack.c.h.b16 %v576
    %v781 = vunpack.c.l.b16 %v577
    %v782 = vunpack.c.h.b16 %v577
    %v783 = vunpack.c.l.b16 %v578
    %v784 = vunpack.c.h.b16 %v578
    %v785 = vunpack.c.l.b16 %v579
    %v786 = vunpack.c.h.b16 %v579
    %v787 = vunpack.c.l.b16 %v580
    %v788 = vunpack.c.h.b16 %v580
    %v789 = vunpack.c.l.b16 %v581
    %v790 = vunpack.c.h.b16 %v581
    %v791 = vunpack.c.l.b16 %v582
    %v792 = vunpack.c.h.b16 %v582
    %v793 = vunpack.c.l.b16 %v583
    %v794 = vunpack.c.h.b16 %v583
    %v795 = vunpack.c.l.b16 %v584
    %v796 = vunpack.c.h.b16 %v584
    %v797 = vunpack.c.l.b16 %v585
    %v798 = vunpack.c.h.b16 %v585
    %v799 = vunpack.c.l.b16 %v586
    %v800 = vunpack.c.h.b16 %v586
    %v801 = vunpack.c.l.b16 %v587
    %v802 = vunpack.c.h.b16 %v587
    %v803 = vunpack.c.l.b16 %v588
    %v804 = vunpack.c.h.b16 %v588
    %v805 = vunpack.c.l.b16 %v589
    %v806 = vunpack.c.h.b16 %v589
    %v807 = vunpack.c.l.b16 %v590
    %v808 = vunpack.c.h.b16 %v590
    %v809 = vunpack.c.l.b16 %v591
    %v810 = vunpack.c.h.b16 %v591
    %v811 = vunpack.c.l.b16 %v592
    %v812 = vunpack.c.h.b16 %v592
    %v813 = vunpack.c.l.b16 %v593
    %v814 = vunpack.c.h.b16 %v593
    %v815 = vunpack.c.l.b16 %v594
    %v816 = vunpack.c.h.b16 %v594
    %v817 = vunpack.c.l.b16 %v595
    %v818 = vunpack.c.h.b16 %v595
    %v819 = vunpack.c.l.b16 %v596
    %v820 = vunpack.c.h.b16 %v596
    %v821 = vunpack.c.l.b16 %v597
    %v822 = vunpack.c.h.b16 %v597
    %v823 = vunpack.c.l.b16 %v598
    %v824 = vunpack.c.h.b16 %v598
    %v825 = vunpack.c.l.b16 %v599
    %v826 = vunpack.c.h.b16 %v599
    %v827 = vunpack.c.l.b16 %v600
    %v828 = vunpack.c.h.b16 %v600
    %v829 = vunpack.c.l.b16 %v601
    %v830 = vunpack.c.h.b16 %v601
    %v831 = vunpack.c.l.b16 %v602
    %v832 = vunpack.c.h.b16 %v602
    %v833 = vunpack.c.l.b16 %v603
    %v834 = vunpack.c.h.b16 %v603
    %v835 = vunpack.c.l.b16 %v604
    %v836 = vunpack.c.h.b16 %v604
    %v837 = vunpack.c.l.b16 %v605
    %v838 = vunpack.c.h.b16 %v605
    %v839 = vunpack.c.l.b16 %v606
    %v840 = vunpack.c.h.b16 %v606
    %v841 = vunpack.c.l.b16 %v607
    %v842 = vunpack.c.h.b16 %v607
    %v843 = vunpack.c.l.b16 %v608
    %v844 = vunpack.c.h.b16 %v608
    %v845 = vunpack.c.l.b16 %v609
    %v846 = vunpack.c.h.b16 %v609
    %v847 = vunpack.c.l.b16 %v610
    %v848 = vunpack.c.h.b16 %v610
    %v849 = vunpack.c.l.b16 %v611
    %v850 = vunpack.c.h.b16 %v611
    %v851 = vunpack.c.l.b16 %v612
    %v852 = vunpack.c.h.b16 %v612
    %v853 = vpack.c.b16 %v695, %v693
    %v854 = vpack.c.b16 %v696, %v694
    %v855 = vpack.c.b16 %v699, %v697
    %v856 = vpack.c.b16 %v700, %v698
    %v857 = vpack.c.b16 %v703, %v701
    %v858 = vpack.c.b16 %v704, %v702
    %v859 = vpack.c.b16 %v707, %v705
    %v860 = vpack.c.b16 %v708, %v706
    %v861 = vpack.c.b16 %v711, %v709
    %v862 = vpack.c.b16 %v712, %v710
    %v863 = vpack.c.b16 %v715, %v713
    %v864 = vpack.c.b16 %v716, %v714
    %v865 = vpack.c.b16 %v719, %v717
    %v866 = vpack.c.b16 %v720, %v718
    %v867 = vpack.c.b16 %v723, %v721
    %v868 = vpack.c.b16 %v724, %v722
    %v869 = vpack.c.b16 %v727, %v725
    %v870 = vpack.c.b16 %v728, %v726
    %v871 = vpack.c.b16 %v731, %v729
    %v872 = vpack.c.b16 %v732, %v730
    %v873 = vpack.c.b16 %v735, %v733
    %v874 = vpack.c.b16 %v736, %v734
    %v875 = vpack.c.b16 %v739, %v737
    %v876 = vpack.c.b16 %v740, %v738
    %v877 = vpack.c.b16 %v743, %v741
    %v878 = vpack.c.b16 %v744, %v742
    %v879 = vpack.c.b16 %v747, %v745
    %v880 = vpack.c.b16 %v748, %v746
    %v881 = vpack.c.b16 %v751, %v749
    %v882 = vpack.c.b16 %v752, %v750
    %v883 = vpack.c.b16 %v755, %v753
    %v884 = vpack.c.b16 %v756, %v754
    %v885 = vpack.c.b16 %v759, %v757
    %v886 = vpack.c.b16 %v760, %v758
    %v887 = vpack.c.b16 %v763, %v761
    %v888 = vpack.c.b16 %v764, %v762
    %v889 = vpack.c.b16 %v767, %v765
    %v890 = vpack.c.b16 %v768, %v766
    %v891 = vpack.c.b16 %v771, %v769
    %v892 = vpack.c.b16 %v772, %v770
    %v893 = vpack.c.b16 %v775, %v773
    %v894 = vpack.c.b16 %v776, %v774
    %v895 = vpack.c.b16 %v779, %v777
    %v896 = vpack.c.b16 %v780, %v778
    %v897 = vpack.c.b16 %v783, %v781
    %v898 = vpack.c.b16 %v784, %v782
    %v899 = vpack.c.b16 %v787, %v785
    %v900 = vpack.c.b16 %v788, %v786
    %v901 = vpack.c.b16 %v791, %v789
    %v902 = vpack.c.b16 %v792, %v790
    %v903 = vpack.c.b16 %v795, %v793
    %v904 = vpack.c.b16 %v796, %v794
    %v905 = vpack.c.b16 %v799, %v797
    %v906 = vpack.c.b16 %v800, %v798
    %v907 = vpack.c.b16 %v803, %v801
    %v908 = vpack.c.b16 %v804, %v802
    %v909 = vpack.c.b16 %v807, %v805
    %v910 = vpack.c.b16 %v808, %v806
    %v911 = vpack.c.b16 %v811, %v809
    %v912 = vpack.c.b16 %v812, %v810
    %v913 = vpack.c.b16 %v815, %v813
    %v914 = vpack.c.b16 %v816, %v814
    %v915 = vpack.c.b16 %v819, %v817
    %v916 = vpack.c.b16 %v820, %v818
    %v917 = vpack.c.b16 %v823, %v821
    %v918 = vpack.c.b16 %v824, %v822
    %v919 = vpack.c.b16 %v827, %v825
    %v920 = vpack.c.b16 %v828, %v826
    %v921 = vpack.c.b16 %v831, %v829
    %v922 = vpack.c.b16 %v832, %v830
    %v923 = vpack.c.b16 %v835, %v833
    %v924 = vpack.c.b16 %v836, %v834
    %v925 = vpack.c.b16 %v839, %v837
    %v926 = vpack.c.b16 %v840, %v838
    %v927 = vpack.c.b16 %v843, %v841
    %v928 = vpack.c.b16 %v844, %v842
    %v929 = vpack.c.b16 %v847, %v845
    %v930 = vpack.c.b16 %v848, %v846
    %v931 = vpack.c.b16 %v851, %v849
    %v932 = vpack.c.b16 %v852, %v850
    %1013 = vmatprep.subr.bf16.mxu0 %v854
    %1014 = vmatpush1.bf16.msra.mxu0 %v853
    %1015 = vmatprep.subr.bf16.mxu0 %v856
    %1016 = vmatpush1.bf16.msra.mxu0 %v855
    %1017 = vmatprep.subr.bf16.mxu0 %v858
    %1018 = vmatpush1.bf16.msra.mxu0 %v857
    %1019 = vmatprep.subr.bf16.mxu0 %v860
    %1020 = vmatpush1.bf16.msra.mxu0 %v859
    %1021 = vmatprep.subr.bf16.mxu0 %v862
    %1022 = vmatpush1.bf16.msra.mxu0 %v861
    %1023 = vmatprep.subr.bf16.mxu0 %v864
    %1024 = vmatpush1.bf16.msra.mxu0 %v863
    %1025 = vmatprep.subr.bf16.mxu0 %v866
    %1026 = vmatpush1.bf16.msra.mxu0 %v865
    %1027 = vmatprep.subr.bf16.mxu0 %v868
    %1028 = vmatpush1.bf16.msra.mxu0 %v867
    %1029 = vmatprep.subr.bf16.mxu0 %v870
    %1030 = vmatpush1.bf16.msra.mxu0 %v869
    %1031 = vmatprep.subr.bf16.mxu0 %v872
    %1032 = vmatpush1.bf16.msra.mxu0 %v871
    %1033 = vmatprep.subr.bf16.mxu0 %v874
    %1034 = vmatpush1.bf16.msra.mxu0 %v873
    %1035 = vmatprep.subr.bf16.mxu0 %v876
    %1036 = vmatpush1.bf16.msra.mxu0 %v875
    %1037 = vmatprep.subr.bf16.mxu0 %v878
    %1038 = vmatpush1.bf16.msra.mxu0 %v877
    %1039 = vmatprep.subr.bf16.mxu0 %v880
    %1040 = vmatpush1.bf16.msra.mxu0 %v879
    %1041 = vmatprep.subr.bf16.mxu0 %v882
    %1042 = vmatpush1.bf16.msra.mxu0 %v881
    %1043 = vmatprep.subr.bf16.mxu0 %v884
    %1044 = vmatpush1.bf16.msra.mxu0 %v883
    %1045 = vmatprep.mubr.bf16.mxu0 %v466
    %1046 = vmatmul.mubr.bf16.gmra.mrb[0].mxu0 %v445
    %v1047 = vpop.f32.mrb[0].mxu0
    %v1048 = vadd.f32 0.0, %v1047
    %v1049 = vpop.f32.mrb[0].mxu0
    %v1050 = vadd.f32 0.0, %v1049
    %v1051 = vpop.f32.mrb[0].mxu0
    %v1052 = vadd.f32 0.0, %v1051
    %v1053 = vpop.f32.mrb[0].mxu0
    %v1054 = vadd.f32 0.0, %v1053
    %1055 = vmatprep.mubr.bf16.mxu0 %v467
    %1056 = vmatmul.mubr.bf16.gmra.mrb[0].mxu0 %v446
    %v1057 = vpop.f32.mrb[0].mxu0
    %v1058 = vadd.f32 0.0, %v1057
    %v1059 = vpop.f32.mrb[0].mxu0
    %v1060 = vadd.f32 0.0, %v1059
    %v1061 = vpop.f32.mrb[0].mxu0
    %v1062 = vadd.f32 0.0, %v1061
    %v1063 = vpop.f32.mrb[0].mxu0
    %v1064 = vadd.f32 0.0, %v1063
    %1065 = vmatprep.mubr.bf16.mxu0 %v468
    %1066 = vmatmul.mubr.bf16.gmra.mrb[0].mxu0 %v447
    %v1067 = vpop.f32.mrb[0].mxu0
    %v1068 = vadd.f32 0.0, %v1067
    %v1069 = vpop.f32.mrb[0].mxu0
    %v1070 = vadd.f32 0.0, %v1069
    %v1071 = vpop.f32.mrb[0].mxu0
    %v1072 = vadd.f32 0.0, %v1071
    %v1073 = vpop.f32.mrb[0].mxu0
    %v1074 = vadd.f32 0.0, %v1073
    %1075 = vmatprep.mubr.bf16.mxu0 %v469
    %1076 = vmatmul.mubr.bf16.gmra.mrb[0].mxu0 %v448
    %v1077 = vpop.f32.mrb[0].mxu0
    %v1078 = vadd.f32 0.0, %v1077
    %v1079 = vpop.f32.mrb[0].mxu0
    %v1080 = vadd.f32 0.0, %v1079
    %v1081 = vpop.f32.mrb[0].mxu0
    %v1082 = vadd.f32 0.0, %v1081
    %v1083 = vpop.f32.mrb[0].mxu0
    %v1084 = vadd.f32 0.0, %v1083
    %1085 = vdwg.mxu0
    %1086 = vmatprep.subr.bf16.mxu0 %v886
    %1087 = vmatpush1.bf16.msra.mxu0 %v885
    %1088 = vmatprep.subr.bf16.mxu0 %v888
    %1089 = vmatpush1.bf16.msra.mxu0 %v887
    %1090 = vmatprep.subr.bf16.mxu0 %v890
    %1091 = vmatpush1.bf16.msra.mxu0 %v889
    %1092 = vmatprep.subr.bf16.mxu0 %v892
    %1093 = vmatpush1.bf16.msra.mxu0 %v891
    %1094 = vmatprep.subr.bf16.mxu0 %v894
    %1095 = vmatpush1.bf16.msra.mxu0 %v893
    %1096 = vmatprep.subr.bf16.mxu0 %v896
    %1097 = vmatpush1.bf16.msra.mxu0 %v895
    %1098 = vmatprep.subr.bf16.mxu0 %v898
    %1099 = vmatpush1.bf16.msra.mxu0 %v897
    %1100 = vmatprep.subr.bf16.mxu0 %v900
    %1101 = vmatpush1.bf16.msra.mxu0 %v899
    %1102 = vmatprep.subr.bf16.mxu0 %v902
    %1103 = vmatpush1.bf16.msra.mxu0 %v901
    %1104 = vmatprep.subr.bf16.mxu0 %v904
    %1105 = vmatpush1.bf16.msra.mxu0 %v903
    %1106 = vmatprep.subr.bf16.mxu0 %v906
    %1107 = vmatpush1.bf16.msra.mxu0 %v905
    %1108 = vmatprep.subr.bf16.mxu0 %v908
    %1109 = vmatpush1.bf16.msra.mxu0 %v907
    %1110 = vmatprep.subr.bf16.mxu0 %v910
    %1111 = vmatpush1.bf16.msra.mxu0 %v909
    %1112 = vmatprep.subr.bf16.mxu0 %v912
    %1113 = vmatpush1.bf16.msra.mxu0 %v911
    %1114 = vmatprep.subr.bf16.mxu0 %v914
    %1115 = vmatpush1.bf16.msra.mxu0 %v913
    %1116 = vmatprep.subr.bf16.mxu0 %v916
    %1117 = vmatpush1.bf16.msra.mxu0 %v915
    %1118 = vmatprep.mubr.bf16.mxu0 %v508
    %1119 = vmatmul.mubr.bf16.gmra.mrb[0].mxu0 %v487
    %v1120 = vpop.f32.mrb[0].mxu0
    %v1121 = vadd.f32 %v1048, %v1120
    %v1122 = vpop.f32.mrb[0].mxu0
    %v1123 = vadd.f32 %v1050, %v1122
    %v1124 = vpop.f32.mrb[0].mxu0
    %v1125 = vadd.f32 %v1052, %v1124
    %v1126 = vpop.f32.mrb[0].mxu0
    %v1127 = vadd.f32 %v1054, %v1126
    %1128 = vmatprep.mubr.bf16.mxu0 %v509
    %1129 = vmatmul.mubr.bf16.gmra.mrb[0].mxu0 %v488
    %v1130 = vpop.f32.mrb[0].mxu0
    %v1131 = vadd.f32 %v1058, %v1130
    %v1132 = vpop.f32.mrb[0].mxu0
    %v1133 = vadd.f32 %v1060, %v1132
    %v1134 = vpop.f32.mrb[0].mxu0
    %v1135 = vadd.f32 %v1062, %v1134
    %v1136 = vpop.f32.mrb[0].mxu0
    %v1137 = vadd.f32 %v1064, %v1136
    %1138 = vmatprep.mubr.bf16.mxu0 %v510
    %1139 = vmatmul.mubr.bf16.gmra.mrb[0].mxu0 %v489
    %v1140 = vpop.f32.mrb[0].mxu0
    %v1141 = vadd.f32 %v1068, %v1140
    %v1142 = vpop.f32.mrb[0].mxu0
    %v1143 = vadd.f32 %v1070, %v1142
    %v1144 = vpop.f32.mrb[0].mxu0
    %v1145 = vadd.f32 %v1072, %v1144
    %v1146 = vpop.f32.mrb[0].mxu0
    %v1147 = vadd.f32 %v1074, %v1146
    %1148 = vmatprep.mubr.bf16.mxu0 %v511
    %1149 = vmatmul.mubr.bf16.gmra.mrb[0].mxu0 %v490
    %v1150 = vpop.f32.mrb[0].mxu0
    %v1151 = vadd.f32 %v1078, %v1150
    %v1152 = vpop.f32.mrb[0].mxu0
    %v1153 = vadd.f32 %v1080, %v1152
    %v1154 = vpop.f32.mrb[0].mxu0
    %v1155 = vadd.f32 %v1082, %v1154
    %v1156 = vpop.f32.mrb[0].mxu0
    %v1157 = vadd.f32 %v1084, %v1156
    %1158 = vdwg.mxu0
    %1159 = vmatprep.subr.bf16.mxu0 %v918
    %1160 = vmatpush1.bf16.msra.mxu0 %v917
    %1161 = vmatprep.subr.bf16.mxu0 %v920
    %1162 = vmatpush1.bf16.msra.mxu0 %v919
    %1163 = vmatprep.subr.bf16.mxu0 %v922
    %1164 = vmatpush1.bf16.msra.mxu0 %v921
    %1165 = vmatprep.subr.bf16.mxu0 %v924
    %1166 = vmatpush1.bf16.msra.mxu0 %v923
    %1167 = vmatprep.subr.bf16.mxu0 %v926
    %1168 = vmatpush1.bf16.msra.mxu0 %v925
    %1169 = vmatprep.subr.bf16.mxu0 %v928
    %1170 = vmatpush1.bf16.msra.mxu0 %v927
    %1171 = vmatprep.subr.bf16.mxu0 %v930
    %1172 = vmatpush1.bf16.msra.mxu0 %v929
    %1173 = vmatprep.subr.bf16.mxu0 %v932
    %1174 = vmatpush1.bf16.msra.mxu0 %v931
    %1175 = vmatprep.subr.bf16.mxu0 0
    %1176 = vmatpush1.bf16.msra.mxu0 0
    %1177 = vmatprep.subr.bf16.mxu0 0
    %1178 = vmatpush1.bf16.msra.mxu0 0
    %1179 = vmatprep.subr.bf16.mxu0 0
    %1180 = vmatpush1.bf16.msra.mxu0 0
    %1181 = vmatprep.subr.bf16.mxu0 0
    %1182 = vmatpush1.bf16.msra.mxu0 0
    %1183 = vmatprep.subr.bf16.mxu0 0
    %1184 = vmatpush1.bf16.msra.mxu0 0
    %1185 = vmatprep.subr.bf16.mxu0 0
    %1186 = vmatpush1.bf16.msra.mxu0 0
    %1187 = vmatprep.subr.bf16.mxu0 0
    %1188 = vmatpush1.bf16.msra.mxu0 0
    %1189 = vmatprep.subr.bf16.mxu0 0
    %1190 = vmatpush1.bf16.msra.mxu0 0
    %1191 = vmatprep.mubr.bf16.mxu0 0
    %1192 = vmatmul.mubr.bf16.gmra.mrb[0].mxu0 %v529
    %v1193 = vpop.f32.mrb[0].mxu0
    %v1194 = vadd.f32 %v1121, %v1193
    %v1195 = vpop.f32.mrb[0].mxu0
    %v1196 = vadd.f32 %v1123, %v1195
    %v1197 = vpop.f32.mrb[0].mxu0
    %v1198 = vadd.f32 %v1125, %v1197
    %v1199 = vpop.f32.mrb[0].mxu0
    %v1200 = vadd.f32 %v1127, %v1199
    %1201 = vmatprep.mubr.bf16.mxu0 0
    %1202 = vmatmul.mubr.bf16.gmra.mrb[0].mxu0 %v530
    %v1203 = vpop.f32.mrb[0].mxu0
    %v1204 = vadd.f32 %v1131, %v1203
    %v1205 = vpop.f32.mrb[0].mxu0
    %v1206 = vadd.f32 %v1133, %v1205
    %v1207 = vpop.f32.mrb[0].mxu0
    %v1208 = vadd.f32 %v1135, %v1207
    %v1209 = vpop.f32.mrb[0].mxu0
    %v1210 = vadd.f32 %v1137, %v1209
    %1211 = vmatprep.mubr.bf16.mxu0 0
    %1212 = vmatmul.mubr.bf16.gmra.mrb[0].mxu0 %v531
    %v1213 = vpop.f32.mrb[0].mxu0
    %v1214 = vadd.f32 %v1141, %v1213
    %v1215 = vpop.f32.mrb[0].mxu0
    %v1216 = vadd.f32 %v1143, %v1215
    %v1217 = vpop.f32.mrb[0].mxu0
    %v1218 = vadd.f32 %v1145, %v1217
    %v1219 = vpop.f32.mrb[0].mxu0
    %v1220 = vadd.f32 %v1147, %v1219
    %1221 = vmatprep.mubr.bf16.mxu0 0
    %1222 = vmatmul.mubr.bf16.gmra.mrb[0].mxu0 %v532
    %v1223 = vpop.f32.mrb[0].mxu0
    %v1224 = vadd.f32 %v1151, %v1223
    %v1225 = vpop.f32.mrb[0].mxu0
    %v1226 = vadd.f32 %v1153, %v1225
    %v1227 = vpop.f32.mrb[0].mxu0
    %v1228 = vadd.f32 %v1155, %v1227
    %v1229 = vpop.f32.mrb[0].mxu0
    %v1230 = vadd.f32 %v1157, %v1229
    %1231 = vdwg.mxu0
    %v1232 = vld [vmem:[%s5] sm:$0x3]
    %v1233 = vld [vmem:[%s6] sm:$0x3]
    %vm1234 = vcmp.lt.s32.totalorder %v162, 21
    %vm1235 = vcmp.lt.s32.totalorder %v163, 21
    %vm1236 = vcmp.lt.s32.totalorder %v164, 21
    %vm1237 = vcmp.lt.s32.totalorder %v165, 21
    %vm1238 = vcmp.lt.s32.totalorder %v166, 21
    %vm1239 = vcmp.lt.s32.totalorder %v167, 21
    %vm1240 = vcmp.lt.s32.totalorder %v168, 21
    %vm1241 = vcmp.lt.s32.totalorder %v169, 21
    %v1242 = vsel %vm1234, 1, 0
    %v1243 = vsel %vm1235, 1, 0
    %v1244 = vsel %vm1236, 1, 0
    %v1245 = vsel %vm1237, 1, 0
    %v1246 = vsel %vm1238, 1, 0
    %v1247 = vsel %vm1239, 1, 0
    %v1248 = vsel %vm1240, 1, 0
    %v1249 = vsel %vm1241, 1, 0
    %v1250 = vcvt.s32.f32 %v1242
    %v1251 = vcvt.s32.f32 %v1243
    %v1252 = vcvt.s32.f32 %v1244
    %v1253 = vcvt.s32.f32 %v1245
    %v1254 = vcvt.s32.f32 %v1246
    %v1255 = vcvt.s32.f32 %v1247
    %v1256 = vcvt.s32.f32 %v1248
    %v1257 = vcvt.s32.f32 %v1249
    %v1258 = vmul.f32 %v1194, %v1250
    %v1259 = vmul.f32 %v1196, %v1250
    %v1260 = vmul.f32 %v1198, %v1251
    %v1261 = vmul.f32 %v1200, %v1251
    %v1262 = vmul.f32 %v1204, %v1252
    %v1263 = vmul.f32 %v1206, %v1252
    %v1264 = vmul.f32 %v1208, %v1253
    %v1265 = vmul.f32 %v1210, %v1253
    %v1266 = vmul.f32 %v1214, %v1254
    %v1267 = vmul.f32 %v1216, %v1254
    %v1268 = vmul.f32 %v1218, %v1255
    %v1269 = vmul.f32 %v1220, %v1255
    %v1270 = vmul.f32 %v1224, %v1256
    %v1271 = vmul.f32 %v1226, %v1256
    %v1272 = vmul.f32 %v1228, %v1257
    %v1273 = vmul.f32 %v1230, %v1257
    %v1274 = vadd.f32 %v1258, %v1260
    %v1275 = vadd.f32 %v1274, %v1262
    %v1276 = vadd.f32 %v1275, %v1264
    %v1277 = vadd.f32 %v1276, %v1266
    %v1278 = vadd.f32 %v1277, %v1268
    %v1279 = vadd.f32 %v1278, %v1270
    %v1280 = vadd.f32 %v1279, %v1272
    %v1281 = vrot.slane %v1280, 4
    %v1282 = vadd.f32 %v1280, %v1281
    %v1283 = vrot.slane %v1282, 2
    %v1284 = vadd.f32 %v1282, %v1283
    %v1285 = vrot.slane %v1284, 1
    %v1286 = vadd.f32 %v1284, %v1285
    %v1287 = vadd.f32 %v1259, %v1261
    %v1288 = vadd.f32 %v1287, %v1263
    %v1289 = vadd.f32 %v1288, %v1265
    %v1290 = vadd.f32 %v1289, %v1267
    %v1291 = vadd.f32 %v1290, %v1269
    %v1292 = vadd.f32 %v1291, %v1271
    %v1293 = vadd.f32 %v1292, %v1273
    %v1294 = vrot.slane %v1293, 4
    %v1295 = vadd.f32 %v1293, %v1294
    %v1296 = vrot.slane %v1295, 2
    %v1297 = vadd.f32 %v1295, %v1296
    %v1298 = vrot.slane %v1297, 1
    %v1299 = vadd.f32 %v1297, %v1298
    %v1300 = vmul.f32 %v1258, %v1258
    %v1301 = vmul.f32 %v1259, %v1259
    %v1302 = vmul.f32 %v1260, %v1260
    %v1303 = vmul.f32 %v1261, %v1261
    %v1304 = vmul.f32 %v1262, %v1262
    %v1305 = vmul.f32 %v1263, %v1263
    %v1306 = vmul.f32 %v1264, %v1264
    %v1307 = vmul.f32 %v1265, %v1265
    %v1308 = vmul.f32 %v1266, %v1266
    %v1309 = vmul.f32 %v1267, %v1267
    %v1310 = vmul.f32 %v1268, %v1268
    %v1311 = vmul.f32 %v1269, %v1269
    %v1312 = vmul.f32 %v1270, %v1270
    %v1313 = vmul.f32 %v1271, %v1271
    %v1314 = vmul.f32 %v1272, %v1272
    %v1315 = vmul.f32 %v1273, %v1273
    %v1316 = vadd.f32 %v1300, %v1302
    %v1317 = vadd.f32 %v1316, %v1304
    %v1318 = vadd.f32 %v1317, %v1306
    %v1319 = vadd.f32 %v1318, %v1308
    %v1320 = vadd.f32 %v1319, %v1310
    %v1321 = vadd.f32 %v1320, %v1312
    %v1322 = vadd.f32 %v1321, %v1314
    %v1323 = vrot.slane %v1322, 4
    %v1324 = vadd.f32 %v1322, %v1323
    %v1325 = vrot.slane %v1324, 2
    %v1326 = vadd.f32 %v1324, %v1325
    %v1327 = vrot.slane %v1326, 1
    %v1328 = vadd.f32 %v1326, %v1327
    %v1329 = vadd.f32 %v1301, %v1303
    %v1330 = vadd.f32 %v1329, %v1305
    %v1331 = vadd.f32 %v1330, %v1307
    %v1332 = vadd.f32 %v1331, %v1309
    %v1333 = vadd.f32 %v1332, %v1311
    %v1334 = vadd.f32 %v1333, %v1313
    %v1335 = vadd.f32 %v1334, %v1315
    %v1336 = vrot.slane %v1335, 4
    %v1337 = vadd.f32 %v1335, %v1336
    %v1338 = vrot.slane %v1337, 2
    %v1339 = vadd.f32 %v1337, %v1338
    %v1340 = vrot.slane %v1339, 1
    %v1341 = vadd.f32 %v1339, %v1340
    %v1342 = vmul.f32 %v1286, 0.023809524
    %v1343 = vmul.f32 %v1299, 0.023809524
    %v1344 = vmul.f32 %v1328, 0.023809524
    %v1345 = vmul.f32 %v1341, 0.023809524
    %v1346 = vmul.f32 %v1342, %v1342
    %v1347 = vmul.f32 %v1343, %v1343
    %v1348 = vsub.f32 %v1344, %v1346
    %v1349 = vsub.f32 %v1345, %v1347
    %v1350 = vmax.f32 %v1348, 0.0
    %v1351 = vmax.f32 %v1349, 0.0
    %v1352 = vadd.f32 %v1350, 0.001
    %v1353 = vadd.f32 %v1351, 0.001
    %v1354 = vrsqrt.pop %v1352
    %v1355 = vrsqrt.pop %v1353
    %v1358 = vcombine.low %v1354, %v1355
    %v1360 = vunpack.c.l.s4 1966171168
    %v1361 = vunpack.c.0.s8 %v1360
    %v1362 = vlaneseq
    %v1363 = vshrl.u32 %v1362, 7
    %v1364 = vsub.s32 %v1361, %v1363
    %v1365 = vrot.slane %v1358, %v1364
    %v1367 = vunpack.c.l.s4 1966171168
    %v1368 = vunpack.c.0.s8 %v1367
    %v1369 = vlaneseq
    %v1370 = vshrl.u32 %v1369, 7
    %v1371 = vsub.s32 %v1368, %v1370
    %v1372 = vrot.slane %v1365, %v1371
    %v1374 = vmul.f32 %v1232, %v1372
    %v1376 = vlaneseq
    %v1377 = vshrl.u32 %v1376, 7
    %v1378 = vsub.s32 0, %v1377
    %v1379 = vrot.slane %v1374, %v1378
    %v1380 = vlaneseq
    %v1381 = vshrl.u32 %v1380, 7
    %v1382 = vsub.s32 1, %v1381
    %v1383 = vrot.slane %v1374, %v1382
    %v1386 = vmul.f32 %v1342, %v1379
    %v1387 = vmul.f32 %v1343, %v1383
    %v1390 = vcombine.low %v1386, %v1387
    %v1392 = vunpack.c.l.s4 1966171168
    %v1393 = vunpack.c.0.s8 %v1392
    %v1394 = vlaneseq
    %v1395 = vshrl.u32 %v1394, 7
    %v1396 = vsub.s32 %v1393, %v1395
    %v1397 = vrot.slane %v1390, %v1396
    %v1399 = vunpack.c.l.s4 1966171168
    %v1400 = vunpack.c.0.s8 %v1399
    %v1401 = vlaneseq
    %v1402 = vshrl.u32 %v1401, 7
    %v1403 = vsub.s32 %v1400, %v1402
    %v1404 = vrot.slane %v1397, %v1403
    %v1406 = vsub.f32 %v1233, %v1404
    %v1407 = vmul.f32 %v1194, %v1379
    %v1408 = vmul.f32 %v1196, %v1383
    %v1409 = vmul.f32 %v1198, %v1379
    %v1410 = vmul.f32 %v1200, %v1383
    %v1411 = vmul.f32 %v1204, %v1379
    %v1412 = vmul.f32 %v1206, %v1383
    %v1413 = vmul.f32 %v1208, %v1379
    %v1414 = vmul.f32 %v1210, %v1383
    %v1415 = vmul.f32 %v1214, %v1379
    %v1416 = vmul.f32 %v1216, %v1383
    %v1417 = vmul.f32 %v1218, %v1379
    %v1418 = vmul.f32 %v1220, %v1383
    %v1419 = vmul.f32 %v1224, %v1379
    %v1420 = vmul.f32 %v1226, %v1383
    %v1421 = vmul.f32 %v1228, %v1379
    %v1422 = vmul.f32 %v1230, %v1383
    %v1424 = vlaneseq
    %v1425 = vshrl.u32 %v1424, 7
    %v1426 = vsub.s32 0, %v1425
    %v1427 = vrot.slane %v1406, %v1426
    %v1428 = vlaneseq
    %v1429 = vshrl.u32 %v1428, 7
    %v1430 = vsub.s32 1, %v1429
    %v1431 = vrot.slane %v1406, %v1430
    %v1434 = vadd.f32 %v1407, %v1427
    %v1435 = vadd.f32 %v1408, %v1431
    %v1436 = vadd.f32 %v1409, %v1427
    %v1437 = vadd.f32 %v1410, %v1431
    %v1438 = vadd.f32 %v1411, %v1427
    %v1439 = vadd.f32 %v1412, %v1431
    %v1440 = vadd.f32 %v1413, %v1427
    %v1441 = vadd.f32 %v1414, %v1431
    %v1442 = vadd.f32 %v1415, %v1427
    %v1443 = vadd.f32 %v1416, %v1431
    %v1444 = vadd.f32 %v1417, %v1427
    %v1445 = vadd.f32 %v1418, %v1431
    %v1446 = vadd.f32 %v1419, %v1427
    %v1447 = vadd.f32 %v1420, %v1431
    %v1448 = vadd.f32 %v1421, %v1427
    %v1449 = vadd.f32 %v1422, %v1431
    %v1450 = vmax.f32 %v1434, 0.0
    %v1451 = vmax.f32 %v1435, 0.0
    %v1452 = vmax.f32 %v1436, 0.0
    %v1453 = vmax.f32 %v1437, 0.0
    %v1454 = vmax.f32 %v1438, 0.0
    %v1455 = vmax.f32 %v1439, 0.0
    %v1456 = vmax.f32 %v1440, 0.0
    %v1457 = vmax.f32 %v1441, 0.0
    %v1458 = vmax.f32 %v1442, 0.0
    %v1459 = vmax.f32 %v1443, 0.0
    %v1460 = vmax.f32 %v1444, 0.0
    %v1461 = vmax.f32 %v1445, 0.0
    %v1462 = vmax.f32 %v1446, 0.0
    %v1463 = vmax.f32 %v1447, 0.0
    %v1464 = vmax.f32 %v1448, 0.0
    %v1465 = vmax.f32 %v1449, 0.0
    %v1466 = vpack.c.bf16 %v1452, %v1450
    %v1467 = vpack.c.bf16 %v1453, %v1451
    %v1468 = vpack.c.bf16 %v1456, %v1454
    %v1469 = vpack.c.bf16 %v1457, %v1455
    %v1470 = vpack.c.bf16 %v1460, %v1458
    %v1471 = vpack.c.bf16 %v1461, %v1459
    %v1472 = vpack.c.bf16 %v1464, %v1462
    %v1473 = vpack.c.bf16 %v1465, %v1463
    %v1474 = vrot.slane %v1450, 1
    %v1475 = vrot.slane %v1451, 1
    %v1476 = vrot.slane %v1452, 1
    %v1477 = vrot.slane %v1453, 1
    %v1478 = vrot.slane %v1454, 1
    %v1479 = vrot.slane %v1455, 1
    %v1480 = vrot.slane %v1456, 1
    %v1481 = vrot.slane %v1457, 1
    %v1482 = vrot.slane %v1458, 1
    %v1483 = vrot.slane %v1459, 1
    %v1484 = vrot.slane %v1460, 1
    %v1485 = vrot.slane %v1461, 1
    %v1486 = vrot.slane %v1462, 1
    %v1487 = vrot.slane %v1463, 1
    %v1488 = vrot.slane %v1464, 1
    %v1489 = vrot.slane %v1465, 1
    %v1490 = vsel %vm457, %v1486, %v1488
    %v1491 = vsel %vm457, %v1487, %v1489
    %v1492 = vsel %vm457, %v1484, %v1486
    %v1493 = vsel %vm457, %v1485, %v1487
    %v1494 = vsel %vm457, %v1482, %v1484
    %v1495 = vsel %vm457, %v1483, %v1485
    %v1496 = vsel %vm457, %v1480, %v1482
    %v1497 = vsel %vm457, %v1481, %v1483
    %v1498 = vsel %vm457, %v1478, %v1480
    %v1499 = vsel %vm457, %v1479, %v1481
    %v1500 = vsel %vm457, %v1476, %v1478
    %v1501 = vsel %vm457, %v1477, %v1479
    %v1502 = vsel %vm457, %v1474, %v1476
    %v1503 = vsel %vm457, %v1475, %v1477
    %v1504 = vsel %vm457, %v1488, %v1474
    %v1505 = vsel %vm457, %v1489, %v1475
    %v1506 = vpack.c.bf16 %v1500, %v1502
    %v1507 = vpack.c.bf16 %v1501, %v1503
    %v1508 = vpack.c.bf16 %v1496, %v1498
    %v1509 = vpack.c.bf16 %v1497, %v1499
    %v1510 = vpack.c.bf16 %v1492, %v1494
    %v1511 = vpack.c.bf16 %v1493, %v1495
    %v1512 = vpack.c.bf16 %v1504, %v1490
    %v1513 = vpack.c.bf16 %v1505, %v1491
    %v1514 = vrot.slane %v1450, 2
    %v1515 = vrot.slane %v1451, 2
    %v1516 = vrot.slane %v1452, 2
    %v1517 = vrot.slane %v1453, 2
    %v1518 = vrot.slane %v1454, 2
    %v1519 = vrot.slane %v1455, 2
    %v1520 = vrot.slane %v1456, 2
    %v1521 = vrot.slane %v1457, 2
    %v1522 = vrot.slane %v1458, 2
    %v1523 = vrot.slane %v1459, 2
    %v1524 = vrot.slane %v1460, 2
    %v1525 = vrot.slane %v1461, 2
    %v1526 = vrot.slane %v1462, 2
    %v1527 = vrot.slane %v1463, 2
    %v1528 = vrot.slane %v1464, 2
    %v1529 = vrot.slane %v1465, 2
    %v1530 = vsel %vm478, %v1526, %v1528
    %v1531 = vsel %vm478, %v1527, %v1529
    %v1532 = vsel %vm478, %v1524, %v1526
    %v1533 = vsel %vm478, %v1525, %v1527
    %v1534 = vsel %vm478, %v1522, %v1524
    %v1535 = vsel %vm478, %v1523, %v1525
    %v1536 = vsel %vm478, %v1520, %v1522
    %v1537 = vsel %vm478, %v1521, %v1523
    %v1538 = vsel %vm478, %v1518, %v1520
    %v1539 = vsel %vm478, %v1519, %v1521
    %v1540 = vsel %vm478, %v1516, %v1518
    %v1541 = vsel %vm478, %v1517, %v1519
    %v1542 = vsel %vm478, %v1514, %v1516
    %v1543 = vsel %vm478, %v1515, %v1517
    %v1544 = vsel %vm478, %v1528, %v1514
    %v1545 = vsel %vm478, %v1529, %v1515
    %v1546 = vpack.c.bf16 %v1540, %v1542
    %v1547 = vpack.c.bf16 %v1541, %v1543
    %v1548 = vpack.c.bf16 %v1536, %v1538
    %v1549 = vpack.c.bf16 %v1537, %v1539
    %v1550 = vpack.c.bf16 %v1532, %v1534
    %v1551 = vpack.c.bf16 %v1533, %v1535
    %v1552 = vpack.c.bf16 %v1544, %v1530
    %v1553 = vpack.c.bf16 %v1545, %v1531
    %v1554 = vld [vmem:[#allocation5] sm:$0xf]
    %v1555 = vld [vmem:[#allocation5 + $0x4] sm:$0xf]
    %v1556 = vld [vmem:[#allocation5 + $0x8] sm:$0xf]
    %v1557 = vld [vmem:[#allocation5 + $0xc] sm:$0xf]
    %v1558 = vld [vmem:[#allocation5 + $0x10] sm:$0xf]
    %v1559 = vld [vmem:[#allocation5 + $0x14] sm:$0xf]
    %v1560 = vld [vmem:[#allocation5 + $0x18] sm:$0xf]
    %v1561 = vld [vmem:[#allocation5 + $0x1c] sm:$0xf]
    %v1562 = vld [vmem:[#allocation5 + $0x20] sm:$0xf]
    %v1563 = vld [vmem:[#allocation5 + $0x24] sm:$0xf]
    %v1564 = vld [vmem:[#allocation5 + $0x28] sm:$0xf]
    %v1565 = vld [vmem:[#allocation5 + $0x2c] sm:$0xf]
    %v1566 = vld [vmem:[#allocation5 + $0x30] sm:$0xf]
    %v1567 = vld [vmem:[#allocation5 + $0x34] sm:$0xf]
    %v1568 = vld [vmem:[#allocation5 + $0x38] sm:$0xf]
    %v1569 = vld [vmem:[#allocation5 + $0x3c] sm:$0xf]
    %v1570 = vld [vmem:[#allocation5 + $0x40] sm:$0xf]
    %v1571 = vld [vmem:[#allocation5 + $0x44] sm:$0xf]
    %v1572 = vld [vmem:[#allocation5 + $0x48] sm:$0xf]
    %v1573 = vld [vmem:[#allocation5 + $0x4c] sm:$0xf]
    %v1574 = vld [vmem:[#allocation5 + $0x50] sm:$0xf]
    %v1575 = vld [vmem:[#allocation5 + $0x54] sm:$0xf]
    %v1576 = vld [vmem:[#allocation5 + $0x58] sm:$0xf]
    %v1577 = vld [vmem:[#allocation5 + $0x5c] sm:$0xf]
    %v1578 = vld [vmem:[#allocation5 + $0x60] sm:$0xf]
    %v1579 = vld [vmem:[#allocation5 + $0x64] sm:$0xf]
    %v1580 = vld [vmem:[#allocation5 + $0x68] sm:$0xf]
    %v1581 = vld [vmem:[#allocation5 + $0x6c] sm:$0xf]
    %v1582 = vld [vmem:[#allocation5 + $0x70] sm:$0xf]
    %v1583 = vld [vmem:[#allocation5 + $0x74] sm:$0xf]
    %v1584 = vld [vmem:[#allocation5 + $0x78] sm:$0xf]
    %v1585 = vld [vmem:[#allocation5 + $0x7c] sm:$0xf]
    %v1586 = vld [vmem:[#allocation5 + $0x80] sm:$0xf]
    %v1587 = vld [vmem:[#allocation5 + $0x84] sm:$0xf]
    %v1588 = vld [vmem:[#allocation5 + $0x88] sm:$0xf]
    %v1589 = vld [vmem:[#allocation5 + $0x8c] sm:$0xf]
    %v1590 = vld [vmem:[#allocation5 + $0x90] sm:$0xf]
    %v1591 = vld [vmem:[#allocation5 + $0x94] sm:$0xf]
    %v1592 = vld [vmem:[#allocation5 + $0x98] sm:$0xf]
    %v1593 = vld [vmem:[#allocation5 + $0x9c] sm:$0xf]
    %v1594 = vld [vmem:[#allocation5 + $0xa0] sm:$0xf]
    %v1595 = vld [vmem:[#allocation5 + $0xa4] sm:$0xf]
    %v1596 = vld [vmem:[#allocation5 + $0xa8] sm:$0xf]
    %v1597 = vld [vmem:[#allocation5 + $0xac] sm:$0xf]
    %v1598 = vld [vmem:[#allocation5 + $0xb0] sm:$0xf]
    %v1599 = vld [vmem:[#allocation5 + $0xb4] sm:$0xf]
    %v1600 = vld [vmem:[#allocation5 + $0xb8] sm:$0xf]
    %v1601 = vld [vmem:[#allocation5 + $0xbc] sm:$0xf]
    %v1602 = vld [vmem:[#allocation5 + $0xc0] sm:$0xf]
    %v1603 = vld [vmem:[#allocation5 + $0xc4] sm:$0xf]
    %v1604 = vld [vmem:[#allocation5 + $0xc8] sm:$0xf]
    %v1605 = vld [vmem:[#allocation5 + $0xcc] sm:$0xf]
    %v1606 = vld [vmem:[#allocation5 + $0xd0] sm:$0xf]
    %v1607 = vld [vmem:[#allocation5 + $0xd4] sm:$0xf]
    %v1608 = vld [vmem:[#allocation5 + $0xd8] sm:$0xf]
    %v1609 = vld [vmem:[#allocation5 + $0xdc] sm:$0xf]
    %v1610 = vld [vmem:[#allocation5 + $0xe0] sm:$0xf]
    %v1611 = vld [vmem:[#allocation5 + $0xe4] sm:$0xf]
    %v1612 = vld [vmem:[#allocation5 + $0xe8] sm:$0xf]
    %v1613 = vld [vmem:[#allocation5 + $0xec] sm:$0xf]
    %v1614 = vld [vmem:[#allocation5 + $0xf0] sm:$0xf]
    %v1615 = vld [vmem:[#allocation5 + $0xf4] sm:$0xf]
    %v1616 = vld [vmem:[#allocation5 + $0xf8] sm:$0xf]
    %v1617 = vld [vmem:[#allocation5 + $0xfc] sm:$0xf]
    %v1618 = vld [vmem:[#allocation5 + $0x100] sm:$0xf]
    %v1619 = vld [vmem:[#allocation5 + $0x104] sm:$0xf]
    %v1620 = vld [vmem:[#allocation5 + $0x108] sm:$0xf]
    %v1621 = vld [vmem:[#allocation5 + $0x10c] sm:$0xf]
    %v1622 = vld [vmem:[#allocation5 + $0x110] sm:$0xf]
    %v1623 = vld [vmem:[#allocation5 + $0x114] sm:$0xf]
    %v1624 = vld [vmem:[#allocation5 + $0x118] sm:$0xf]
    %v1625 = vld [vmem:[#allocation5 + $0x11c] sm:$0xf]
    %v1626 = vld [vmem:[#allocation5 + $0x120] sm:$0xf]
    %v1627 = vld [vmem:[#allocation5 + $0x124] sm:$0xf]
    %v1628 = vld [vmem:[#allocation5 + $0x128] sm:$0xf]
    %v1629 = vld [vmem:[#allocation5 + $0x12c] sm:$0xf]
    %v1630 = vld [vmem:[#allocation5 + $0x130] sm:$0xf]
    %v1631 = vld [vmem:[#allocation5 + $0x134] sm:$0xf]
    %v1632 = vld [vmem:[#allocation5 + $0x138] sm:$0xf]
    %v1633 = vld [vmem:[#allocation5 + $0x13c] sm:$0xf]
    %v1634 = vld [vmem:[#allocation5 + $0x140] sm:$0xf]
    %v1635 = vld [vmem:[#allocation5 + $0x144] sm:$0xf]
    %v1636 = vld [vmem:[#allocation5 + $0x148] sm:$0xf]
    %v1637 = vld [vmem:[#allocation5 + $0x14c] sm:$0xf]
    %v1638 = vld [vmem:[#allocation5 + $0x150] sm:$0xf]
    %v1639 = vld [vmem:[#allocation5 + $0x154] sm:$0xf]
    %v1640 = vld [vmem:[#allocation5 + $0x158] sm:$0xf]
    %v1641 = vld [vmem:[#allocation5 + $0x15c] sm:$0xf]
    %v1642 = vld [vmem:[#allocation5 + $0x160] sm:$0xf]
    %v1643 = vld [vmem:[#allocation5 + $0x164] sm:$0xf]
    %v1644 = vld [vmem:[#allocation5 + $0x168] sm:$0xf]
    %v1645 = vld [vmem:[#allocation5 + $0x16c] sm:$0xf]
    %v1646 = vld [vmem:[#allocation5 + $0x170] sm:$0xf]
    %v1647 = vld [vmem:[#allocation5 + $0x174] sm:$0xf]
    %v1648 = vld [vmem:[#allocation5 + $0x178] sm:$0xf]
    %v1649 = vld [vmem:[#allocation5 + $0x17c] sm:$0xf]
    %v1746 = vunpack.c.l.b16 %v1554
    %v1747 = vunpack.c.l.b16 %v1555
    %v1748 = vunpack.c.l.b16 %v1556
    %v1749 = vunpack.c.l.b16 %v1557
    %v1750 = vunpack.c.l.b16 %v1558
    %v1751 = vunpack.c.l.b16 %v1559
    %v1752 = vunpack.c.l.b16 %v1560
    %v1753 = vunpack.c.l.b16 %v1561
    %v1754 = vunpack.c.l.b16 %v1562
    %v1755 = vunpack.c.l.b16 %v1563
    %v1756 = vunpack.c.l.b16 %v1564
    %v1757 = vunpack.c.l.b16 %v1565
    %v1758 = vunpack.c.l.b16 %v1566
    %v1759 = vunpack.c.l.b16 %v1567
    %v1760 = vunpack.c.l.b16 %v1568
    %v1761 = vunpack.c.l.b16 %v1569
    %v1762 = vunpack.c.l.b16 %v1570
    %v1763 = vunpack.c.l.b16 %v1571
    %v1764 = vunpack.c.l.b16 %v1572
    %v1765 = vunpack.c.l.b16 %v1573
    %v1766 = vunpack.c.l.b16 %v1574
    %v1767 = vunpack.c.l.b16 %v1575
    %v1768 = vunpack.c.l.b16 %v1576
    %v1769 = vunpack.c.l.b16 %v1577
    %v1770 = vunpack.c.l.b16 %v1578
    %v1771 = vunpack.c.l.b16 %v1579
    %v1772 = vunpack.c.l.b16 %v1580
    %v1773 = vunpack.c.l.b16 %v1581
    %v1774 = vunpack.c.l.b16 %v1582
    %v1775 = vunpack.c.l.b16 %v1583
    %v1776 = vunpack.c.l.b16 %v1584
    %v1777 = vunpack.c.l.b16 %v1585
    %v1778 = vunpack.c.l.b16 %v1586
    %v1779 = vunpack.c.l.b16 %v1587
    %v1780 = vunpack.c.l.b16 %v1588
    %v1781 = vunpack.c.l.b16 %v1589
    %v1782 = vunpack.c.l.b16 %v1590
    %v1783 = vunpack.c.l.b16 %v1591
    %v1784 = vunpack.c.l.b16 %v1592
    %v1785 = vunpack.c.l.b16 %v1593
    %v1786 = vunpack.c.l.b16 %v1594
    %v1787 = vunpack.c.l.b16 %v1595
    %v1788 = vunpack.c.l.b16 %v1596
    %v1789 = vunpack.c.l.b16 %v1597
    %v1790 = vunpack.c.l.b16 %v1598
    %v1791 = vunpack.c.l.b16 %v1599
    %v1792 = vunpack.c.l.b16 %v1600
    %v1793 = vunpack.c.l.b16 %v1601
    %v1794 = vunpack.c.l.b16 %v1602
    %v1795 = vunpack.c.l.b16 %v1603
    %v1796 = vunpack.c.l.b16 %v1604
    %v1797 = vunpack.c.l.b16 %v1605
    %v1798 = vunpack.c.l.b16 %v1606
    %v1799 = vunpack.c.l.b16 %v1607
    %v1800 = vunpack.c.l.b16 %v1608
    %v1801 = vunpack.c.l.b16 %v1609
    %v1802 = vunpack.c.l.b16 %v1610
    %v1803 = vunpack.c.l.b16 %v1611
    %v1804 = vunpack.c.l.b16 %v1612
    %v1805 = vunpack.c.l.b16 %v1613
    %v1806 = vunpack.c.l.b16 %v1614
    %v1807 = vunpack.c.l.b16 %v1615
    %v1808 = vunpack.c.l.b16 %v1616
    %v1809 = vunpack.c.l.b16 %v1617
    %v1810 = vunpack.c.l.b16 %v1618
    %v1811 = vunpack.c.l.b16 %v1619
    %v1812 = vunpack.c.l.b16 %v1620
    %v1813 = vunpack.c.l.b16 %v1621
    %v1814 = vunpack.c.l.b16 %v1622
    %v1815 = vunpack.c.l.b16 %v1623
    %v1816 = vunpack.c.l.b16 %v1624
    %v1817 = vunpack.c.l.b16 %v1625
    %v1818 = vunpack.c.l.b16 %v1626
    %v1819 = vunpack.c.l.b16 %v1627
    %v1820 = vunpack.c.l.b16 %v1628
    %v1821 = vunpack.c.l.b16 %v1629
    %v1822 = vunpack.c.l.b16 %v1630
    %v1823 = vunpack.c.l.b16 %v1631
    %v1824 = vunpack.c.l.b16 %v1632
    %v1825 = vunpack.c.l.b16 %v1633
    %v1826 = vunpack.c.l.b16 %v1634
    %v1827 = vunpack.c.l.b16 %v1635
    %v1828 = vunpack.c.l.b16 %v1636
    %v1829 = vunpack.c.l.b16 %v1637
    %v1830 = vunpack.c.l.b16 %v1638
    %v1831 = vunpack.c.l.b16 %v1639
    %v1832 = vunpack.c.l.b16 %v1640
    %v1833 = vunpack.c.l.b16 %v1641
    %v1834 = vunpack.c.l.b16 %v1642
    %v1835 = vunpack.c.l.b16 %v1643
    %v1836 = vunpack.c.l.b16 %v1644
    %v1837 = vunpack.c.l.b16 %v1645
    %v1838 = vunpack.c.l.b16 %v1646
    %v1839 = vunpack.c.l.b16 %v1647
    %v1840 = vunpack.c.l.b16 %v1648
    %v1841 = vunpack.c.l.b16 %v1649
    %v1842 = vpack.c.b16 %v1747, %v1746
    %v1843 = vpack.c.b16 %v1749, %v1748
    %v1844 = vpack.c.b16 %v1751, %v1750
    %v1845 = vpack.c.b16 %v1753, %v1752
    %v1846 = vpack.c.b16 %v1755, %v1754
    %v1847 = vpack.c.b16 %v1757, %v1756
    %v1848 = vpack.c.b16 %v1759, %v1758
    %v1849 = vpack.c.b16 %v1761, %v1760
    %v1850 = vpack.c.b16 %v1763, %v1762
    %v1851 = vpack.c.b16 %v1765, %v1764
    %v1852 = vpack.c.b16 %v1767, %v1766
    %v1853 = vpack.c.b16 %v1769, %v1768
    %v1854 = vpack.c.b16 %v1771, %v1770
    %v1855 = vpack.c.b16 %v1773, %v1772
    %v1856 = vpack.c.b16 %v1775, %v1774
    %v1857 = vpack.c.b16 %v1777, %v1776
    %v1858 = vpack.c.b16 %v1779, %v1778
    %v1859 = vpack.c.b16 %v1781, %v1780
    %v1860 = vpack.c.b16 %v1783, %v1782
    %v1861 = vpack.c.b16 %v1785, %v1784
    %v1862 = vpack.c.b16 %v1787, %v1786
    %v1863 = vpack.c.b16 %v1789, %v1788
    %v1864 = vpack.c.b16 %v1791, %v1790
    %v1865 = vpack.c.b16 %v1793, %v1792
    %v1866 = vpack.c.b16 %v1795, %v1794
    %v1867 = vpack.c.b16 %v1797, %v1796
    %v1868 = vpack.c.b16 %v1799, %v1798
    %v1869 = vpack.c.b16 %v1801, %v1800
    %v1870 = vpack.c.b16 %v1803, %v1802
    %v1871 = vpack.c.b16 %v1805, %v1804
    %v1872 = vpack.c.b16 %v1807, %v1806
    %v1873 = vpack.c.b16 %v1809, %v1808
    %v1874 = vpack.c.b16 %v1811, %v1810
    %v1875 = vpack.c.b16 %v1813, %v1812
    %v1876 = vpack.c.b16 %v1815, %v1814
    %v1877 = vpack.c.b16 %v1817, %v1816
    %v1878 = vpack.c.b16 %v1819, %v1818
    %v1879 = vpack.c.b16 %v1821, %v1820
    %v1880 = vpack.c.b16 %v1823, %v1822
    %v1881 = vpack.c.b16 %v1825, %v1824
    %v1882 = vpack.c.b16 %v1827, %v1826
    %v1883 = vpack.c.b16 %v1829, %v1828
    %v1884 = vpack.c.b16 %v1831, %v1830
    %v1885 = vpack.c.b16 %v1833, %v1832
    %v1886 = vpack.c.b16 %v1835, %v1834
    %v1887 = vpack.c.b16 %v1837, %v1836
    %v1888 = vpack.c.b16 %v1839, %v1838
    %v1889 = vpack.c.b16 %v1841, %v1840
    %1938 = vmatprep.subr.bf16.mxu0 0
    %1939 = vmatpush1.bf16.msra.mxu0 %v1842
    %1940 = vmatprep.subr.bf16.mxu0 0
    %1941 = vmatpush1.bf16.msra.mxu0 %v1843
    %1942 = vmatprep.subr.bf16.mxu0 0
    %1943 = vmatpush1.bf16.msra.mxu0 %v1844
    %1944 = vmatprep.subr.bf16.mxu0 0
    %1945 = vmatpush1.bf16.msra.mxu0 %v1845
    %1946 = vmatprep.subr.bf16.mxu0 0
    %1947 = vmatpush1.bf16.msra.mxu0 %v1846
    %1948 = vmatprep.subr.bf16.mxu0 0
    %1949 = vmatpush1.bf16.msra.mxu0 %v1847
    %1950 = vmatprep.subr.bf16.mxu0 0
    %1951 = vmatpush1.bf16.msra.mxu0 %v1848
    %1952 = vmatprep.subr.bf16.mxu0 0
    %1953 = vmatpush1.bf16.msra.mxu0 %v1849
    %1954 = vmatprep.subr.bf16.mxu0 0
    %1955 = vmatpush1.bf16.msra.mxu0 %v1850
    %1956 = vmatprep.subr.bf16.mxu0 0
    %1957 = vmatpush1.bf16.msra.mxu0 %v1851
    %1958 = vmatprep.subr.bf16.mxu0 0
    %1959 = vmatpush1.bf16.msra.mxu0 %v1852
    %1960 = vmatprep.subr.bf16.mxu0 0
    %1961 = vmatpush1.bf16.msra.mxu0 %v1853
    %1962 = vmatprep.subr.bf16.mxu0 0
    %1963 = vmatpush1.bf16.msra.mxu0 %v1854
    %1964 = vmatprep.subr.bf16.mxu0 0
    %1965 = vmatpush1.bf16.msra.mxu0 %v1855
    %1966 = vmatprep.subr.bf16.mxu0 0
    %1967 = vmatpush1.bf16.msra.mxu0 %v1856
    %1968 = vmatprep.subr.bf16.mxu0 0
    %1969 = vmatpush1.bf16.msra.mxu0 %v1857
    %1970 = vmatprep.mubr.bf16.mxu0 %v1467
    %1971 = vmatmul.mubr.bf16.gmra.mrb[0].mxu0 %v1466
    %v1972 = vpop.f32.mrb[0].mxu0
    %v1973 = vadd.f32 0.0, %v1972
    %v1974 = vpop.f32.mrb[0].mxu0
    %v1975 = vpop.f32.mrb[0].mxu0
    %v1976 = vadd.f32 0.0, %v1975
    %v1977 = vpop.f32.mrb[0].mxu0
    %1978 = vmatprep.mubr.bf16.mxu0 %v1469
    %1979 = vmatmul.mubr.bf16.gmra.mrb[0].mxu0 %v1468
    %v1980 = vpop.f32.mrb[0].mxu0
    %v1981 = vadd.f32 0.0, %v1980
    %v1982 = vpop.f32.mrb[0].mxu0
    %v1983 = vpop.f32.mrb[0].mxu0
    %v1984 = vadd.f32 0.0, %v1983
    %v1985 = vpop.f32.mrb[0].mxu0
    %1986 = vmatprep.mubr.bf16.mxu0 %v1471
    %1987 = vmatmul.mubr.bf16.gmra.mrb[0].mxu0 %v1470
    %v1988 = vpop.f32.mrb[0].mxu0
    %v1989 = vadd.f32 0.0, %v1988
    %v1990 = vpop.f32.mrb[0].mxu0
    %v1991 = vpop.f32.mrb[0].mxu0
    %v1992 = vadd.f32 0.0, %v1991
    %v1993 = vpop.f32.mrb[0].mxu0
    %1994 = vmatprep.mubr.bf16.mxu0 %v1473
    %1995 = vmatmul.mubr.bf16.gmra.mrb[0].mxu0 %v1472
    %v1996 = vpop.f32.mrb[0].mxu0
    %v1997 = vadd.f32 0.0, %v1996
    %v1998 = vpop.f32.mrb[0].mxu0
    %v1999 = vpop.f32.mrb[0].mxu0
    %v2000 = vadd.f32 0.0, %v1999
    %v2001 = vpop.f32.mrb[0].mxu0
    %2002 = vdwg.mxu0
    %2003 = vmatprep.subr.bf16.mxu0 0
    %2004 = vmatpush1.bf16.msra.mxu0 %v1858
    %2005 = vmatprep.subr.bf16.mxu0 0
    %2006 = vmatpush1.bf16.msra.mxu0 %v1859
    %2007 = vmatprep.subr.bf16.mxu0 0
    %2008 = vmatpush1.bf16.msra.mxu0 %v1860
    %2009 = vmatprep.subr.bf16.mxu0 0
    %2010 = vmatpush1.bf16.msra.mxu0 %v1861
    %2011 = vmatprep.subr.bf16.mxu0 0
    %2012 = vmatpush1.bf16.msra.mxu0 %v1862
    %2013 = vmatprep.subr.bf16.mxu0 0
    %2014 = vmatpush1.bf16.msra.mxu0 %v1863
    %2015 = vmatprep.subr.bf16.mxu0 0
    %2016 = vmatpush1.bf16.msra.mxu0 %v1864
    %2017 = vmatprep.subr.bf16.mxu0 0
    %2018 = vmatpush1.bf16.msra.mxu0 %v1865
    %2019 = vmatprep.subr.bf16.mxu0 0
    %2020 = vmatpush1.bf16.msra.mxu0 %v1866
    %2021 = vmatprep.subr.bf16.mxu0 0
    %2022 = vmatpush1.bf16.msra.mxu0 %v1867
    %2023 = vmatprep.subr.bf16.mxu0 0
    %2024 = vmatpush1.bf16.msra.mxu0 %v1868
    %2025 = vmatprep.subr.bf16.mxu0 0
    %2026 = vmatpush1.bf16.msra.mxu0 %v1869
    %2027 = vmatprep.subr.bf16.mxu0 0
    %2028 = vmatpush1.bf16.msra.mxu0 %v1870
    %2029 = vmatprep.subr.bf16.mxu0 0
    %2030 = vmatpush1.bf16.msra.mxu0 %v1871
    %2031 = vmatprep.subr.bf16.mxu0 0
    %2032 = vmatpush1.bf16.msra.mxu0 %v1872
    %2033 = vmatprep.subr.bf16.mxu0 0
    %2034 = vmatpush1.bf16.msra.mxu0 %v1873
    %2035 = vmatprep.mubr.bf16.mxu0 %v1507
    %2036 = vmatmul.mubr.bf16.gmra.mrb[0].mxu0 %v1506
    %v2037 = vpop.f32.mrb[0].mxu0
    %v2038 = vadd.f32 %v1973, %v2037
    %v2039 = vpop.f32.mrb[0].mxu0
    %v2040 = vpop.f32.mrb[0].mxu0
    %v2041 = vadd.f32 %v1976, %v2040
    %v2042 = vpop.f32.mrb[0].mxu0
    %2043 = vmatprep.mubr.bf16.mxu0 %v1509
    %2044 = vmatmul.mubr.bf16.gmra.mrb[0].mxu0 %v1508
    %v2045 = vpop.f32.mrb[0].mxu0
    %v2046 = vadd.f32 %v1981, %v2045
    %v2047 = vpop.f32.mrb[0].mxu0
    %v2048 = vpop.f32.mrb[0].mxu0
    %v2049 = vadd.f32 %v1984, %v2048
    %v2050 = vpop.f32.mrb[0].mxu0
    %2051 = vmatprep.mubr.bf16.mxu0 %v1511
    %2052 = vmatmul.mubr.bf16.gmra.mrb[0].mxu0 %v1510
    %v2053 = vpop.f32.mrb[0].mxu0
    %v2054 = vadd.f32 %v1989, %v2053
    %v2055 = vpop.f32.mrb[0].mxu0
    %v2056 = vpop.f32.mrb[0].mxu0
    %v2057 = vadd.f32 %v1992, %v2056
    %v2058 = vpop.f32.mrb[0].mxu0
    %2059 = vmatprep.mubr.bf16.mxu0 %v1513
    %2060 = vmatmul.mubr.bf16.gmra.mrb[0].mxu0 %v1512
    %v2061 = vpop.f32.mrb[0].mxu0
    %v2062 = vadd.f32 %v1997, %v2061
    %v2063 = vpop.f32.mrb[0].mxu0
    %v2064 = vpop.f32.mrb[0].mxu0
    %v2065 = vadd.f32 %v2000, %v2064
    %v2066 = vpop.f32.mrb[0].mxu0
    %2067 = vdwg.mxu0
    %2068 = vmatprep.subr.bf16.mxu0 0
    %2069 = vmatpush1.bf16.msra.mxu0 %v1874
    %2070 = vmatprep.subr.bf16.mxu0 0
    %2071 = vmatpush1.bf16.msra.mxu0 %v1875
    %2072 = vmatprep.subr.bf16.mxu0 0
    %2073 = vmatpush1.bf16.msra.mxu0 %v1876
    %2074 = vmatprep.subr.bf16.mxu0 0
    %2075 = vmatpush1.bf16.msra.mxu0 %v1877
    %2076 = vmatprep.subr.bf16.mxu0 0
    %2077 = vmatpush1.bf16.msra.mxu0 %v1878
    %2078 = vmatprep.subr.bf16.mxu0 0
    %2079 = vmatpush1.bf16.msra.mxu0 %v1879
    %2080 = vmatprep.subr.bf16.mxu0 0
    %2081 = vmatpush1.bf16.msra.mxu0 %v1880
    %2082 = vmatprep.subr.bf16.mxu0 0
    %2083 = vmatpush1.bf16.msra.mxu0 %v1881
    %2084 = vmatprep.subr.bf16.mxu0 0
    %2085 = vmatpush1.bf16.msra.mxu0 %v1882
    %2086 = vmatprep.subr.bf16.mxu0 0
    %2087 = vmatpush1.bf16.msra.mxu0 %v1883
    %2088 = vmatprep.subr.bf16.mxu0 0
    %2089 = vmatpush1.bf16.msra.mxu0 %v1884
    %2090 = vmatprep.subr.bf16.mxu0 0
    %2091 = vmatpush1.bf16.msra.mxu0 %v1885
    %2092 = vmatprep.subr.bf16.mxu0 0
    %2093 = vmatpush1.bf16.msra.mxu0 %v1886
    %2094 = vmatprep.subr.bf16.mxu0 0
    %2095 = vmatpush1.bf16.msra.mxu0 %v1887
    %2096 = vmatprep.subr.bf16.mxu0 0
    %2097 = vmatpush1.bf16.msra.mxu0 %v1888
    %2098 = vmatprep.subr.bf16.mxu0 0
    %2099 = vmatpush1.bf16.msra.mxu0 %v1889
    %2100 = vmatprep.mubr.bf16.mxu0 %v1547
    %2101 = vmatmul.mubr.bf16.gmra.mrb[0].mxu0 %v1546
    %v2102 = vpop.f32.mrb[0].mxu0
    %v2103 = vadd.f32 %v2038, %v2102
    %v2104 = vpop.f32.mrb[0].mxu0
    %v2105 = vpop.f32.mrb[0].mxu0
    %v2106 = vadd.f32 %v2041, %v2105
    %v2107 = vpop.f32.mrb[0].mxu0
    %2108 = vmatprep.mubr.bf16.mxu0 %v1549
    %2109 = vmatmul.mubr.bf16.gmra.mrb[0].mxu0 %v1548
    %v2110 = vpop.f32.mrb[0].mxu0
    %v2111 = vadd.f32 %v2046, %v2110
    %v2112 = vpop.f32.mrb[0].mxu0
    %v2113 = vpop.f32.mrb[0].mxu0
    %v2114 = vadd.f32 %v2049, %v2113
    %v2115 = vpop.f32.mrb[0].mxu0
    %2116 = vmatprep.mubr.bf16.mxu0 %v1551
    %2117 = vmatmul.mubr.bf16.gmra.mrb[0].mxu0 %v1550
    %v2118 = vpop.f32.mrb[0].mxu0
    %v2119 = vadd.f32 %v2054, %v2118
    %v2120 = vpop.f32.mrb[0].mxu0
    %v2121 = vpop.f32.mrb[0].mxu0
    %v2122 = vadd.f32 %v2057, %v2121
    %v2123 = vpop.f32.mrb[0].mxu0
    %2124 = vmatprep.mubr.bf16.mxu0 %v1553
    %2125 = vmatmul.mubr.bf16.gmra.mrb[0].mxu0 %v1552
    %v2126 = vpop.f32.mrb[0].mxu0
    %v2127 = vadd.f32 %v2062, %v2126
    %v2128 = vpop.f32.mrb[0].mxu0
    %v2129 = vpop.f32.mrb[0].mxu0
    %v2130 = vadd.f32 %v2065, %v2129
    %v2131 = vpop.f32.mrb[0].mxu0
    %2132 = vdwg.mxu0
    %v2133 = vld [vmem:[%s8] sm:$0x1]
    %v2134 = vld [vmem:[%s9] sm:$0x1]
    %vm2135 = vcmp.lt.s32.totalorder %v162, 19
    %vm2136 = vcmp.lt.s32.totalorder %v163, 19
    %vm2137 = vcmp.lt.s32.totalorder %v164, 19
    %vm2138 = vcmp.lt.s32.totalorder %v165, 19
    %vm2139 = vcmp.lt.s32.totalorder %v166, 19
    %vm2140 = vcmp.lt.s32.totalorder %v167, 19
    %vm2141 = vcmp.lt.s32.totalorder %v168, 19
    %vm2142 = vcmp.lt.s32.totalorder %v169, 19
    %v2143 = vsel %vm2135, 1, 0
    %v2144 = vsel %vm2136, 1, 0
    %v2145 = vsel %vm2137, 1, 0
    %v2146 = vsel %vm2138, 1, 0
    %v2147 = vsel %vm2139, 1, 0
    %v2148 = vsel %vm2140, 1, 0
    %v2149 = vsel %vm2141, 1, 0
    %v2150 = vsel %vm2142, 1, 0
    %v2151 = vcvt.s32.f32 %v2143
    %v2152 = vcvt.s32.f32 %v2144
    %v2153 = vcvt.s32.f32 %v2145
    %v2154 = vcvt.s32.f32 %v2146
    %v2155 = vcvt.s32.f32 %v2147
    %v2156 = vcvt.s32.f32 %v2148
    %v2157 = vcvt.s32.f32 %v2149
    %v2158 = vcvt.s32.f32 %v2150
    %v2159 = vmul.f32 %v2103, %v2151
    %v2160 = vmul.f32 %v2106, %v2152
    %v2161 = vmul.f32 %v2111, %v2153
    %v2162 = vmul.f32 %v2114, %v2154
    %v2163 = vmul.f32 %v2119, %v2155
    %v2164 = vmul.f32 %v2122, %v2156
    %v2165 = vmul.f32 %v2127, %v2157
    %v2166 = vmul.f32 %v2130, %v2158
    %v2167 = vadd.f32 %v2159, %v2160
    %v2168 = vadd.f32 %v2167, %v2161
    %v2169 = vadd.f32 %v2168, %v2162
    %v2170 = vadd.f32 %v2169, %v2163
    %v2171 = vadd.f32 %v2170, %v2164
    %v2172 = vadd.f32 %v2171, %v2165
    %v2173 = vadd.f32 %v2172, %v2166
    %v2174 = vrot.slane %v2173, 4
    %v2175 = vadd.f32 %v2173, %v2174
    %v2176 = vrot.slane %v2175, 2
    %v2177 = vadd.f32 %v2175, %v2176
    %v2178 = vrot.slane %v2177, 1
    %v2179 = vadd.f32 %v2177, %v2178
    %v2180 = vmul.f32 %v2159, %v2159
    %v2181 = vmul.f32 %v2160, %v2160
    %v2182 = vmul.f32 %v2161, %v2161
    %v2183 = vmul.f32 %v2162, %v2162
    %v2184 = vmul.f32 %v2163, %v2163
    %v2185 = vmul.f32 %v2164, %v2164
    %v2186 = vmul.f32 %v2165, %v2165
    %v2187 = vmul.f32 %v2166, %v2166
    %v2188 = vadd.f32 %v2180, %v2181
    %v2189 = vadd.f32 %v2188, %v2182
    %v2190 = vadd.f32 %v2189, %v2183
    %v2191 = vadd.f32 %v2190, %v2184
    %v2192 = vadd.f32 %v2191, %v2185
    %v2193 = vadd.f32 %v2192, %v2186
    %v2194 = vadd.f32 %v2193, %v2187
    %v2195 = vrot.slane %v2194, 4
    %v2196 = vadd.f32 %v2194, %v2195
    %v2197 = vrot.slane %v2196, 2
    %v2198 = vadd.f32 %v2196, %v2197
    %v2199 = vrot.slane %v2198, 1
    %v2200 = vadd.f32 %v2198, %v2199
    %v2201 = vmul.f32 %v2179, 0.02631579
    %v2202 = vmul.f32 %v2200, 0.02631579
    %v2203 = vmul.f32 %v2201, %v2201
    %v2204 = vsub.f32 %v2202, %v2203
    %v2205 = vmax.f32 %v2204, 0.0
    %v2206 = vadd.f32 %v2205, 0.001
    %v2207 = vrsqrt.pop %v2206
    %v2208 = vmul.f32 %v2133, %v2207
    %v2209 = vmul.f32 %v2201, %v2208
    %v2210 = vsub.f32 %v2134, %v2209
    %v2212 = vlaneseq
    %v2213 = vshrl.u32 %v2212, 7
    %v2214 = vsub.s32 0, %v2213
    %v2215 = vrot.slane %v2208, %v2214
    %v2217 = vmul.f32 %v2103, %v2215
    %v2218 = vmul.f32 %v2106, %v2215
    %v2219 = vmul.f32 %v2111, %v2215
    %v2220 = vmul.f32 %v2114, %v2215
    %v2221 = vmul.f32 %v2119, %v2215
    %v2222 = vmul.f32 %v2122, %v2215
    %v2223 = vmul.f32 %v2127, %v2215
    %v2224 = vmul.f32 %v2130, %v2215
    %v2226 = vlaneseq
    %v2227 = vshrl.u32 %v2226, 7
    %v2228 = vsub.s32 0, %v2227
    %v2229 = vrot.slane %v2210, %v2228
    %v2231 = vadd.f32 %v2217, %v2229
    %v2232 = vadd.f32 %v2218, %v2229
    %v2233 = vadd.f32 %v2219, %v2229
    %v2234 = vadd.f32 %v2220, %v2229
    %v2235 = vadd.f32 %v2221, %v2229
    %v2236 = vadd.f32 %v2222, %v2229
    %v2237 = vadd.f32 %v2223, %v2229
    %v2238 = vadd.f32 %v2224, %v2229
    %v2239 = vmax.f32 %v2231, 0.0
    %v2240 = vmax.f32 %v2232, 0.0
    %v2241 = vmax.f32 %v2233, 0.0
    %v2242 = vmax.f32 %v2234, 0.0
    %v2243 = vmax.f32 %v2235, 0.0
    %v2244 = vmax.f32 %v2236, 0.0
    %v2245 = vmax.f32 %v2237, 0.0
    %v2246 = vmax.f32 %v2238, 0.0
    %v2247 = vmul.f32 %v2239, %v2151
    %v2248 = vmul.f32 %v2240, %v2152
    %v2249 = vmul.f32 %v2241, %v2153
    %v2250 = vmul.f32 %v2242, %v2154
    %v2251 = vmul.f32 %v2243, %v2155
    %v2252 = vmul.f32 %v2244, %v2156
    %v2253 = vmul.f32 %v2245, %v2157
    %v2254 = vmul.f32 %v2246, %v2158
    %v2255 = vadd.f32 %v2247, %v2248
    %v2256 = vadd.f32 %v2255, %v2249
    %v2257 = vadd.f32 %v2256, %v2250
    %v2258 = vrot.slane %v2257, 4
    %v2259 = vadd.f32 %v2257, %v2258
    %v2260 = vrot.slane %v2259, 2
    %v2261 = vadd.f32 %v2259, %v2260
    %v2262 = vrot.slane %v2261, 1
    %v2263 = vadd.f32 %v2261, %v2262
    %v2264 = vmul.f32 %v2263, 0.05263158
    %v2265 = vadd.f32 %v2251, %v2252
    %v2266 = vadd.f32 %v2265, %v2253
    %v2267 = vadd.f32 %v2266, %v2254
    %v2268 = vrot.slane %v2267, 4
    %v2269 = vadd.f32 %v2267, %v2268
    %v2270 = vrot.slane %v2269, 2
    %v2271 = vadd.f32 %v2269, %v2270
    %v2272 = vrot.slane %v2271, 1
    %v2273 = vadd.f32 %v2271, %v2272
    %v2274 = vmul.f32 %v2273, 0.05263158
    %vm2275 = vcmask 1040384
    %v2276 = vsel %vm2275, %v2264, %v2274
    %2277 = vst [vmem:[#allocation7] sm:$0x3] %v2276
    // Predicated region
    $region50: #{block_fcn_forward.1} parent=1 // pred_check
      _
    $region51: #{block_fcn_forward.1} parent=1 // pred_check_branch
      %2279 = sbr.rel (0) target = $region53
    $region52: #{block_fcn_forward.1} parent=1 // pred_region
      %s2281 = ssub.s32 32, 32
      %2282 = vsyncadd [#allocation4], %s2281
      %s2284 = sshll.u32 [#allocation7], 4
      %s2285 = int_to_ptr.vmem [resolvable:$true] %s2284
      %2287 = dma.vmem_to_hbm [thread:$0]  %s2285, 32, %s10, [#allocation4]
    $region53: #{block_fcn_forward.1} parent=1 // pred_fallthru
      _
    // Predicated region
    $region54: #{block_fcn_forward.1} parent=1 // pred_check
      _
    $region55: #{block_fcn_forward.1} parent=1 // pred_check_branch
      %2289 = sbr.rel (0) target = $region57
    $region56: #{block_fcn_forward.1} parent=1 // pred_region
      %2290 = dma.done [#allocation4], 32
    $region57: #{block_fcn_forward.1} parent=1 // pred_fallthru
      _
    %2291 = vsyncpa [#allocation3], 1
    %2292 = vsyncpa [#allocation6], 1
    %2293 = vsyncpa [#allocation4], 1

</llo_original>
